<compile_context>
chip_gen: v5e
topology: v5e:2x2
jax: 0.10.0
libtpu: 0.0.40
codegen_flags: <defaults>
</compile_context>

<pallas_src>
import functools

import jax
import jax.numpy as jnp
from jax import lax
from jax.experimental import pallas as pl
from jax.experimental.pallas import tpu as pltpu

_F32 = jnp.float32
_HIGHEST = jax.lax.Precision.HIGHEST
_VMEM_LIMIT = 48 * 1024 * 1024   # <= ~48 MiB: safe on v7x (64 MiB) and v5e/v6e


def _round_up(x: int, m: int) -> int:
    return ((x + m - 1) // m) * m


def _pick_tile(padded_dim: int, max_tile: int, unit: int) -> int:
    """Largest tile (multiple of `unit`, <= max_tile) that minimizes total padding."""
    best_t, best_total = unit, _round_up(padded_dim, unit)
    t = unit
    while t <= max_tile:
        total = _round_up(padded_dim, t)
        if total <= best_total:          # prefer the larger tile on ties
            best_t, best_total = t, total
        t += unit
    return best_t


# ------------------------- fused (block-diagonal) fast path -------------------------
def _fused_kernel(x_ref, w_ref, b_ref, y_ref):
    # [xr | xi] @ blockdiag(wr, wi) + [br | bi]  ->  [yr | yi]   (single MXU pass)
    y_ref[...] = (
        jnp.dot(x_ref[...], w_ref[...],
                preferred_element_type=jnp.float32, precision=_HIGHEST)
        + b_ref[...]
    ).astype(y_ref.dtype)


@functools.partial(jax.jit, static_argnames=("N", "Np", "tm_max"))
def _forward_fused(x, w_fused, b_fused, *, N, Np, tm_max):
    M, K = x.shape
    Kp = w_fused.shape[0] // 2
    xr = jnp.real(x).astype(_F32)
    xi = jnp.imag(x).astype(_F32)

    tm = min(tm_max, _round_up(M, 8))
    Mp = _round_up(M, tm)
    # One packed [xr | xi] slab -> single input stream, single lane-dense output slab.
    x_packed = jnp.concatenate(
        [jnp.pad(xr, ((0, Mp - M), (0, Kp - K))),
         jnp.pad(xi, ((0, Mp - M), (0, Kp - K)))], axis=1)            # (Mp, 2Kp)

    y = pl.pallas_call(
        _fused_kernel,
        out_shape=jax.ShapeDtypeStruct((Mp, 2 * Np), _F32),
        grid_spec=pltpu.PrefetchScalarGridSpec(
            num_scalar_prefetch=0,
            grid=(Mp // tm,),
            in_specs=[
                pl.BlockSpec((tm, 2 * Kp), lambda i: (i, 0)),
                pl.BlockSpec((2 * Kp, 2 * Np), lambda i: (0, 0)),
                pl.BlockSpec((1, 2 * Np), lambda i: (0, 0)),
            ],
            out_specs=pl.BlockSpec((tm, 2 * Np), lambda i: (i, 0)),
        ),
        compiler_params=pltpu.CompilerParams(
            dimension_semantics=("parallel",),
            vmem_limit_bytes=_VMEM_LIMIT,
        ),
    )(x_packed, w_fused, b_fused)

    return lax.complex(y[:M, :N], y[:M, Np:Np + N])


# ----------------------------- general tiled path -----------------------------------
def _stacked_kernel(x_ref, w_ref, b_ref, y_ref):
    # x_ref: (2, tm, tk)  w_ref: (2, tk, tn)  b_ref: (2, 1, tn)  y_ref: (2, tm, tn)
    # The output block is f32 and resident across k -> accumulate in place (no scratch).
    k = pl.program_id(2)

    @pl.when(k == 0)
    def _init():
        y_ref[...] = jnp.zeros_like(y_ref)

    y_ref[...] += jnp.einsum(
        "bmk,bkn->bmn", x_ref[...], w_ref[...],
        preferred_element_type=jnp.float32, precision=_HIGHEST)

    @pl.when(k == pl.num_programs(2) - 1)
    def _finalize():
        y_ref[...] += b_ref[...]        # bias added once, hoisted out of the K loop


@functools.partial(jax.jit, static_argnames=("N", "tm_max", "tn", "tk"))
def _forward_stacked(x, w_stack, b_stack, *, N, tm_max, tn, tk):
    M, K = x.shape
    _, Kp, Np = w_stack.shape
    xr = jnp.real(x).astype(_F32)
    xi = jnp.imag(x).astype(_F32)

    tm = _pick_tile(_round_up(M, 8), tm_max, 8)
    Mp = _round_up(M, tm)
    # v7x shards "parallel" grid axes across its 2 TensorCores: make sure at least
    # one parallel axis has >= 2 blocks when the problem allows it.
    if Mp // tm == 1 and Np // tn == 1:
        if tn % 256 == 0:
            tn //= 2                     # Np stays divisible, still a 128-multiple
        elif Mp >= 16:
            tm = _round_up(Mp // 2, 8)
            Mp = _round_up(M, tm)

    x_stack = jnp.stack(
        [jnp.pad(xr, ((0, Mp - M), (0, Kp - K))),
         jnp.pad(xi, ((0, Mp - M), (0, Kp - K)))])                    # (2, Mp, Kp)

    y = pl.pallas_call(
        _stacked_kernel,
        out_shape=jax.ShapeDtypeStruct((2, Mp, Np), _F32),
        grid_spec=pltpu.PrefetchScalarGridSpec(
            num_scalar_prefetch=0,
            grid=(Mp // tm, Np // tn, Kp // tk),
            in_specs=[
                pl.BlockSpec((2, tm, tk), lambda i, j, k: (0, i, k)),
                pl.BlockSpec((2, tk, tn), lambda i, j, k: (0, k, j)),
                pl.BlockSpec((2, 1, tn), lambda i, j, k: (0, 0, j)),
            ],
            out_specs=pl.BlockSpec((2, tm, tn), lambda i, j, k: (0, i, j)),
        ),
        compiler_params=pltpu.CompilerParams(
            dimension_semantics=("parallel", "parallel", "arbitrary"),
            vmem_limit_bytes=_VMEM_LIMIT,
        ),
    )(x_stack, w_stack, b_stack)

    return lax.complex(y[0, :M, :N], y[1, :M, :N])


# ----------------------------------- module -----------------------------------------
class ComplexDense:
    """y = complex(x.real @ w_real + b_real, x.imag @ w_imag + b_imag).

    Weights/bias are padded, packed and cast to f32 ONCE at construction
    (hoisted out of the per-call path).
    """

    # Tile caps sized for all generations: double-buffered footprint stays well
    # under v7x's 64 MiB VMEM while remaining MXU-friendly on v5e/v6e.
    _TM, _TN, _TK = 256, 512, 512

    def __init__(self, w_real, w_imag, b_real, b_imag):
        K, N = w_real.shape
        self.N = N

        wr = jnp.asarray(w_real, _F32)
        wi = jnp.asarray(w_imag, _F32)
        br = jnp.asarray(b_real, _F32).reshape(1, N)
        bi = jnp.asarray(b_imag, _F32).reshape(1, N)

        Kp = _round_up(K, 128)
        Np = _round_up(N, 128)
        # Fast path only when the fused block-diagonal matmul fits one tile
        # (otherwise block-diag would waste 2x FLOPs / bandwidth).
        self.fast = (2 * Kp <= self._TK) and (2 * Np <= self._TN)

        if self.fast:
            wrp = jnp.pad(wr, ((0, Kp - K), (0, Np - N)))
            wip = jnp.pad(wi, ((0, Kp - K), (0, Np - N)))
            zeros = jnp.zeros((Kp, Np), _F32)
            self.w_fused = jnp.block([[wrp, zeros], [zeros, wip]])     # (2Kp, 2Np)
            self.b_fused = jnp.concatenate(
                [jnp.pad(br, ((0, 0), (0, Np - N))),
                 jnp.pad(bi, ((0, 0), (0, Np - N)))], axis=1)          # (1, 2Np)
            self.Np = Np
        else:
            self.tk = _pick_tile(Kp, self._TK, 128)
            self.tn = _pick_tile(Np, self._TN, 128)
            Kp = _round_up(K, self.tk)
            Np = _round_up(N, self.tn)
            wrp = jnp.pad(wr, ((0, Kp - K), (0, Np - N)))
            wip = jnp.pad(wi, ((0, Kp - K), (0, Np - N)))
            self.w_stack = jnp.stack([wrp, wip])                       # (2, Kp, Np)
            self.b_stack = jnp.stack(
                [jnp.pad(br, ((0, 0), (0, Np - N))),
                 jnp.pad(bi, ((0, 0), (0, Np - N)))])                  # (2, 1, Np)

    def __call__(self, x):
        if self.fast:
            return _forward_fused(x, self.w_fused, self.b_fused,
                                  N=self.N, Np=self.Np, tm_max=self._TM)
        return _forward_stacked(x, self.w_stack, self.b_stack,
                                N=self.N, tm_max=self._TM,
                                tn=self.tn, tk=self.tk)


if __name__ == "__main__":
    key = jax.random.PRNGKey(0)
    ks = jax.random.split(key, 12)

    def make_case(kslice, batch, cin, cout):
        k_xr, k_xi, k_wr, k_wi, k_br, k_bi = kslice
        bound = 1.0 / (cin ** 0.5)   # PyTorch nn.Linear-style init
        w_real = jax.random.uniform(k_wr, (cin, cout), _F32, -bound, bound)
        w_imag = jax.random.uniform(k_wi, (cin, cout), _F32, -bound, bound)
        b_real = jax.random.uniform(k_br, (cout,), _F32, -bound, bound)
        b_imag = jax.random.uniform(k_bi, (cout,), _F32, -bound, bound)
        xr = jax.random.normal(k_xr, (batch, cin), _F32)
        xi = jax.random.normal(k_xi, (batch, cin), _F32)
        return xr, xi, w_real, w_imag, b_real, b_imag

    # Case 1: production-like small shape  -> fused block-diagonal fast path.
    # Case 2: larger shape                 -> tiled (i, j, k) stacked-plane kernel.
    for kslice, (batch, cin, cout) in ((ks[:6], (8, 32, 64)),
                                       (ks[6:], (96, 384, 640))):
        xr, xi, w_real, w_imag, b_real, b_imag = make_case(kslice, batch, cin, cout)
        x = lax.complex(xr, xi)                       # complex64, like torch.complex
        layer = ComplexDense(w_real, w_imag, b_real, b_imag)
        y = jax.block_until_ready(layer(x))

        y_ref = lax.complex(
            jnp.dot(xr, w_real, precision=_HIGHEST) + b_real,
            jnp.dot(xi, w_imag, precision=_HIGHEST) + b_imag)

        assert y.shape == (batch, cout) and y.dtype == jnp.complex64
        assert jnp.allclose(y, y_ref, atol=1e-5, rtol=1e-5)

    print("KERNEL_OK")
</pallas_src>

<mosaic_0001>
module attributes {stable_mosaic.version = 11 : i64} {
  func.func @_fused_kernel(%arg0: i32, %arg1: memref<8x256xf32, #tpu.memory_space<vmem>>, %arg2: memref<256x256xf32, #tpu.memory_space<vmem>>, %arg3: memref<1x256xf32, #tpu.memory_space<vmem>>, %arg4: memref<8x256xf32, #tpu.memory_space<vmem>>) attributes {dimension_semantics = [#tpu.dimension_semantics<parallel>], iteration_bounds = array<i64: 1>, scalar_prefetch = 0 : i64, scratch_operands = 0 : i64, tpu.core_type = #tpu.core_type<tc>, window_params = [{transform_indices = @transform_0, window_bounds = array<i64: 8, 256>}, {pipeline_mode = #tpu.pipeline_mode<synchronous>, transform_indices = @transform_1, window_bounds = array<i64: 256, 256>}, {pipeline_mode = #tpu.pipeline_mode<synchronous>, transform_indices = @transform_2, window_bounds = array<i64: 1, 256>}, {transform_indices = @transform_3, window_bounds = array<i64: 8, 256>}]} {
    %c0 = arith.constant 0 : index
    %c0_0 = arith.constant 0 : index
    %0 = vector.load %arg1[%c0, %c0_0] : memref<8x256xf32, #tpu.memory_space<vmem>>, vector<8x256xf32>
    %c0_1 = arith.constant 0 : index
    %c0_2 = arith.constant 0 : index
    %1 = vector.load %arg2[%c0_1, %c0_2] : memref<256x256xf32, #tpu.memory_space<vmem>>, vector<256x256xf32>
    %cst = arith.constant dense<0.000000e+00> : vector<8x256xf32>
    %2 = tpu.matmul %0, %1, %cst {dimension_numbers = #tpu.dot_dimension_numbers<[1], [0], [0], [1], [0, 0, 1, 1], [], []>, precision = #tpu.contract_precision<fp32>} : vector<8x256xf32>, vector<256x256xf32>, vector<8x256xf32> -> vector<8x256xf32>
    %c0_3 = arith.constant 0 : index
    %c0_4 = arith.constant 0 : index
    %3 = vector.load %arg3[%c0_3, %c0_4] : memref<1x256xf32, #tpu.memory_space<vmem>>, vector<1x256xf32>
    %4 = vector.broadcast %3 : vector<1x256xf32> to vector<8x256xf32>
    %5 = arith.addf %2, %4 : vector<8x256xf32>
    %c0_5 = arith.constant 0 : index
    %c0_6 = arith.constant 0 : index
    %6 = vector.load %arg4[%c0_5, %c0_6] : memref<8x256xf32, #tpu.memory_space<vmem>>, vector<8x256xf32>
    tpu.vector_store %arg4[%c0_5, %c0_6], %5 {strides = array<i32>} : memref<8x256xf32, #tpu.memory_space<vmem>>, vector<8x256xf32>,
    return
  }
  func.func @transform_0(%arg0: i32) -> (i32, i32) {
    %c0_i32 = arith.constant 0 : i32
    %c0_i32_0 = arith.constant 0 : i32
    return %arg0, %c0_i32 : i32, i32
  }
  func.func @transform_1(%arg0: i32) -> (i32, i32) {
    %c0_i32 = arith.constant 0 : i32
    %c0_i32_0 = arith.constant 0 : i32
    %c0_i32_1 = arith.constant 0 : i32
    return %c0_i32, %c0_i32_0 : i32, i32
  }
  func.func @transform_2(%arg0: i32) -> (i32, i32) {
    %c0_i32 = arith.constant 0 : i32
    %c0_i32_0 = arith.constant 0 : i32
    %c0_i32_1 = arith.constant 0 : i32
    return %c0_i32, %c0_i32_0 : i32, i32
  }
  func.func @transform_3(%arg0: i32) -> (i32, i32) {
    %c0_i32 = arith.constant 0 : i32
    %c0_i32_0 = arith.constant 0 : i32
    return %arg0, %c0_i32 : i32, i32
  }
}

</mosaic_0001>

<llo_original>
// kernel: custom-call
$region0: #{custom-call}
  %s0 = inlined_call_operand.hbm [shape: c64[8,32], index: 0, kind: input, shape index: {}]
  %s1 = inlined_call_operand.vmem [shape: f32[8,32], index: 1, kind: output, shape index: {}]
  $region1: #{custom-call} parent=0
    #allocation0 [shape = 's32[1]{0}', space=sflag, size = 0x4, scoped, tag = 'scoped memory for custom-call']
    %2 = vsyncpa [#allocation0], 0
    %s4 = sshll.u32 %s0, 4
    %s5 = int_to_ptr.hbm [resolvable:$true] %s4
    %s6 = sshll.u32 %s1, 4
    %s7 = int_to_ptr.vmem [resolvable:$true] %s6
    %9 = dma.hbm_to_vmem [thread:$0]  %s5, 128, %s7, [#allocation0]
    %11 = dma.done [#allocation0], 128
    %12 = vsyncpa [#allocation0], 1

// kernel: custom-call.1
$region0: #{custom-call.1}
  %s0 = inlined_call_operand.hbm [shape: c64[8,32], index: 0, kind: input, shape index: {}]
  %s1 = inlined_call_operand.vmem [shape: f32[8,32], index: 1, kind: output, shape index: {}]
  %s2 = scalar_lea.hbm %s0, 8
  $region1: #{custom-call.1} parent=0
    #allocation0 [shape = 's32[1]{0}', space=sflag, size = 0x4, scoped, tag = 'scoped memory for custom-call.1']
    %3 = vsyncpa [#allocation0], 0
    %s5 = sshll.u32 %s2, 4
    %s6 = int_to_ptr.hbm [resolvable:$true] %s5
    %s7 = sshll.u32 %s1, 4
    %s8 = int_to_ptr.vmem [resolvable:$true] %s7
    %10 = dma.hbm_to_vmem [thread:$0]  %s6, 128, %s8, [#allocation0]
    %12 = dma.done [#allocation0], 128
    %13 = vsyncpa [#allocation0], 1

// kernel: custom-call.2
$region0: #{custom-call.2}
  %s0 = inlined_call_operand.vmem [shape: f32[8,64], index: 0, kind: input, shape index: {}]
  %s1 = inlined_call_operand.vmem [shape: f32[8,64], index: 1, kind: input, shape index: {}]
  %s2 = inlined_call_operand.hbm [shape: c64[8,64], index: 2, kind: output, shape index: {}]
  %s3 = scalar_lea.hbm %s2, 8
  $region1: #{custom-call.2} parent=0
    #allocation0 [shape = 's32[1]{0}', space=sflag, size = 0x4, scoped, tag = 'scoped memory for custom-call.2']
    %4 = vsyncpa [#allocation0], 0
    %s6 = sshll.u32 %s0, 4
    %s7 = int_to_ptr.vmem [resolvable:$true] %s6
    %s8 = sshll.u32 %s2, 4
    %s9 = int_to_ptr.hbm [resolvable:$true] %s8
    %11 = dma.vmem_to_hbm [thread:$0]  %s7, 128, %s9, [#allocation0]
    %13 = dma.done [#allocation0], 128
    %14 = vsyncpa [#allocation0], 1
  $region2: #{custom-call.2} parent=0
    #allocation1 [shape = 's32[1]{0}', space=sflag, size = 0x4, scoped, tag = 'scoped memory for custom-call.2']
    %15 = vsyncpa [#allocation1], 0
    %s17 = sshll.u32 %s1, 4
    %s18 = int_to_ptr.vmem [resolvable:$true] %s17
    %s19 = sshll.u32 %s3, 4
    %s20 = int_to_ptr.hbm [resolvable:$true] %s19
    %22 = dma.vmem_to_hbm [thread:$0]  %s18, 128, %s20, [#allocation1]
    %24 = dma.done [#allocation1], 128
    %25 = vsyncpa [#allocation1], 1

// kernel: _forward_fused.1
$region0: #{_forward_fused.1}
  #allocation0 [shape = 'u32[]', space=smem, size = 0x4, offset = 0x4, fixed_abs, tag = 'smem constant byte address 0x4 - core index']
  #allocation1 [shape = 'u32[72,128]{1,0:T(1,128)}', space=vmem, size = 0x9000, scoped, tag = 'internal scratch']
  %s0 = inlined_call_operand.vmem [shape: f32[8,256], index: 0, kind: input, shape index: {}]
  %s1 = inlined_call_operand.hbm [shape: f32[256,256], index: 1, kind: input, shape index: {}]
  %s2 = inlined_call_operand.vmem [shape: f32[1,256], index: 2, kind: input, shape index: {}]
  %s3 = inlined_call_operand.vmem [shape: f32[8,256], index: 3, kind: output, shape index: {}]
  %s4 = sld [smem:[#allocation0]]
  $region26: #{_forward_fused.1} parent=0
    _
  %s6 = ssub.s32 1, %s4
  %s7 = scalar_select 0, %s6, %s4
  $region1: #{_forward_fused.1} parent=0
    #allocation2 [shape = 'u8[262144]{0}', space=vmem, size = 0x40000, scoped, tag = 'input window, operand 1, single buffered']
    #allocation3 [shape = 's32[1]{0}', space=sflag, size = 0x4, scoped, tag = 'scoped memory for _forward_fused.1']
    %8 = vsyncpa [#allocation3], 0
    // Predicated region
    $region2: #{_forward_fused.1} parent=1 // pred_check
      _
    $region3: #{_forward_fused.1} parent=1 // pred_check_branch
      %10 = sbr.rel (0) target = $region5
    $region4: #{_forward_fused.1} parent=1 // pred_region
      _
    $region5: #{_forward_fused.1} parent=1 // pred_fallthru
      _
    // Predicated region
    $region6: #{_forward_fused.1} parent=1 // pred_check
      _
    $region7: #{_forward_fused.1} parent=1 // pred_check_branch
      %12 = sbr.rel (0) target = $region9
    $region8: #{_forward_fused.1} parent=1 // pred_region
      %14 = vsyncadd [#allocation3], 0
      %s15 = sshll.u32 %s1, 4
      %s16 = int_to_ptr.hbm [resolvable:$true] %s15
      %s17 = sshll.u32 [#allocation2], 4
      %s18 = int_to_ptr.vmem [resolvable:$true] %s17
      %23 = dma.hbm_to_vmem [thread:$0]  %s16, 8192, %s18, [#allocation3], 256, 256, 16
    $region9: #{_forward_fused.1} parent=1 // pred_fallthru
      _
    // Predicated region
    $region10: #{_forward_fused.1} parent=1 // pred_check
      _
    $region11: #{_forward_fused.1} parent=1 // pred_check_branch
      %25 = sbr.rel (0) target = $region13
    $region12: #{_forward_fused.1} parent=1 // pred_region
      _
    $region13: #{_forward_fused.1} parent=1 // pred_fallthru
      _
    // Predicated region
    $region14: #{_forward_fused.1} parent=1 // pred_check
      _
    $region15: #{_forward_fused.1} parent=1 // pred_check_branch
      %27 = sbr.rel (0) target = $region17
    $region16: #{_forward_fused.1} parent=1 // pred_region
      %29 = dma.done [#allocation3], 8192
    $region17: #{_forward_fused.1} parent=1 // pred_fallthru
      _
    %v30 = vld [vmem:[%s0] sm:$0xff]
    %v31 = vld [vmem:[%s0 + $0x8] sm:$0xff]
    %v32 = vld [vmem:[#allocation2] sm:$0xff]
    %v33 = vld [vmem:[#allocation2 + $0x8] sm:$0xff]
    %v34 = vld [vmem:[#allocation2 + $0x10] sm:$0xff]
    %v35 = vld [vmem:[#allocation2 + $0x18] sm:$0xff]
    %v36 = vld [vmem:[#allocation2 + $0x20] sm:$0xff]
    %v37 = vld [vmem:[#allocation2 + $0x28] sm:$0xff]
    %v38 = vld [vmem:[#allocation2 + $0x30] sm:$0xff]
    %v39 = vld [vmem:[#allocation2 + $0x38] sm:$0xff]
    %v40 = vld [vmem:[#allocation2 + $0x40] sm:$0xff]
    %v41 = vld [vmem:[#allocation2 + $0x48] sm:$0xff]
    %v42 = vld [vmem:[#allocation2 + $0x50] sm:$0xff]
    %v43 = vld [vmem:[#allocation2 + $0x58] sm:$0xff]
    %v44 = vld [vmem:[#allocation2 + $0x60] sm:$0xff]
    %v45 = vld [vmem:[#allocation2 + $0x68] sm:$0xff]
    %v46 = vld [vmem:[#allocation2 + $0x70] sm:$0xff]
    %v47 = vld [vmem:[#allocation2 + $0x78] sm:$0xff]
    %v48 = vld [vmem:[#allocation2 + $0x80] sm:$0xff]
    %v49 = vld [vmem:[#allocation2 + $0x88] sm:$0xff]
    %v50 = vld [vmem:[#allocation2 + $0x90] sm:$0xff]
    %v51 = vld [vmem:[#allocation2 + $0x98] sm:$0xff]
    %v52 = vld [vmem:[#allocation2 + $0xa0] sm:$0xff]
    %v53 = vld [vmem:[#allocation2 + $0xa8] sm:$0xff]
    %v54 = vld [vmem:[#allocation2 + $0xb0] sm:$0xff]
    %v55 = vld [vmem:[#allocation2 + $0xb8] sm:$0xff]
    %v56 = vld [vmem:[#allocation2 + $0xc0] sm:$0xff]
    %v57 = vld [vmem:[#allocation2 + $0xc8] sm:$0xff]
    %v58 = vld [vmem:[#allocation2 + $0xd0] sm:$0xff]
    %v59 = vld [vmem:[#allocation2 + $0xd8] sm:$0xff]
    %v60 = vld [vmem:[#allocation2 + $0xe0] sm:$0xff]
    %v61 = vld [vmem:[#allocation2 + $0xe8] sm:$0xff]
    %v62 = vld [vmem:[#allocation2 + $0xf0] sm:$0xff]
    %v63 = vld [vmem:[#allocation2 + $0xf8] sm:$0xff]
    %v64 = vld [vmem:[#allocation2 + $0x100] sm:$0xff]
    %v65 = vld [vmem:[#allocation2 + $0x108] sm:$0xff]
    %v66 = vld [vmem:[#allocation2 + $0x110] sm:$0xff]
    %v67 = vld [vmem:[#allocation2 + $0x118] sm:$0xff]
    %v68 = vld [vmem:[#allocation2 + $0x120] sm:$0xff]
    %v69 = vld [vmem:[#allocation2 + $0x128] sm:$0xff]
    %v70 = vld [vmem:[#allocation2 + $0x130] sm:$0xff]
    %v71 = vld [vmem:[#allocation2 + $0x138] sm:$0xff]
    %v72 = vld [vmem:[#allocation2 + $0x140] sm:$0xff]
    %v73 = vld [vmem:[#allocation2 + $0x148] sm:$0xff]
    %v74 = vld [vmem:[#allocation2 + $0x150] sm:$0xff]
    %v75 = vld [vmem:[#allocation2 + $0x158] sm:$0xff]
    %v76 = vld [vmem:[#allocation2 + $0x160] sm:$0xff]
    %v77 = vld [vmem:[#allocation2 + $0x168] sm:$0xff]
    %v78 = vld [vmem:[#allocation2 + $0x170] sm:$0xff]
    %v79 = vld [vmem:[#allocation2 + $0x178] sm:$0xff]
    %v80 = vld [vmem:[#allocation2 + $0x180] sm:$0xff]
    %v81 = vld [vmem:[#allocation2 + $0x188] sm:$0xff]
    %v82 = vld [vmem:[#allocation2 + $0x190] sm:$0xff]
    %v83 = vld [vmem:[#allocation2 + $0x198] sm:$0xff]
    %v84 = vld [vmem:[#allocation2 + $0x1a0] sm:$0xff]
    %v85 = vld [vmem:[#allocation2 + $0x1a8] sm:$0xff]
    %v86 = vld [vmem:[#allocation2 + $0x1b0] sm:$0xff]
    %v87 = vld [vmem:[#allocation2 + $0x1b8] sm:$0xff]
    %v88 = vld [vmem:[#allocation2 + $0x1c0] sm:$0xff]
    %v89 = vld [vmem:[#allocation2 + $0x1c8] sm:$0xff]
    %v90 = vld [vmem:[#allocation2 + $0x1d0] sm:$0xff]
    %v91 = vld [vmem:[#allocation2 + $0x1d8] sm:$0xff]
    %v92 = vld [vmem:[#allocation2 + $0x1e0] sm:$0xff]
    %v93 = vld [vmem:[#allocation2 + $0x1e8] sm:$0xff]
    %v94 = vld [vmem:[#allocation2 + $0x1f0] sm:$0xff]
    %v95 = vld [vmem:[#allocation2 + $0x1f8] sm:$0xff]
    %v96 = vld [vmem:[%s2] sm:$0x3]
    %v98 = vperm.slane %v96, 0
    %v99 = vperm.slane %v96, 1
    %v102 = vand.u32 %v62, 4294901760
    %103 = vmatpush.msra.mxu0 %v102
    %v104 = vand.u32 %v60, 4294901760
    %105 = vmatpush.msra.mxu0 %v104
    %v106 = vand.u32 %v58, 4294901760
    %107 = vmatpush.msra.mxu0 %v106
    %v108 = vand.u32 %v56, 4294901760
    %109 = vmatpush.msra.mxu0 %v108
    %v110 = vand.u32 %v54, 4294901760
    %111 = vmatpush.msra.mxu0 %v110
    %v112 = vand.u32 %v52, 4294901760
    %113 = vmatpush.msra.mxu0 %v112
    %v114 = vand.u32 %v50, 4294901760
    %115 = vmatpush.msra.mxu0 %v114
    %v116 = vand.u32 %v48, 4294901760
    %117 = vmatpush.msra.mxu0 %v116
    %v118 = vand.u32 %v46, 4294901760
    %119 = vmatpush.msra.mxu0 %v118
    %v120 = vand.u32 %v44, 4294901760
    %121 = vmatpush.msra.mxu0 %v120
    %v122 = vand.u32 %v42, 4294901760
    %123 = vmatpush.msra.mxu0 %v122
    %v124 = vand.u32 %v40, 4294901760
    %125 = vmatpush.msra.mxu0 %v124
    %v126 = vand.u32 %v38, 4294901760
    %127 = vmatpush.msra.mxu0 %v126
    %v128 = vand.u32 %v36, 4294901760
    %129 = vmatpush.msra.mxu0 %v128
    %v130 = vand.u32 %v34, 4294901760
    %131 = vmatpush.msra.mxu0 %v130
    %v132 = vand.u32 %v32, 4294901760
    %133 = vmatpush.msra.mxu0 %v132
    %v134 = vand.u32 %v30, 4294901760
    %v135 = vsub.f32 %v30, %v134
    %v136 = vand.u32 %v135, 4294901760
    %v137 = vsub.f32 %v135, %v136
    %v138 = vand.u32 %v137, 4294901760
    %139 = vmatmul.f32.gmra.mxu0 %v138
    %v140 = vpop.f32.mrf.mxu0
    %v141 = vadd.f32 %v98, %v140
    %142 = vdwg.mxu0
    %v143 = vand.u32 %v62, 4294901760
    %v144 = vsub.f32 %v62, %v143
    %v145 = vand.u32 %v144, 4294901760
    %v146 = vsub.f32 %v144, %v145
    %v147 = vand.u32 %v146, 4294901760
    %148 = vmatpush.msra.mxu0 %v147
    %v149 = vand.u32 %v60, 4294901760
    %v150 = vsub.f32 %v60, %v149
    %v151 = vand.u32 %v150, 4294901760
    %v152 = vsub.f32 %v150, %v151
    %v153 = vand.u32 %v152, 4294901760
    %154 = vmatpush.msra.mxu0 %v153
    %v155 = vand.u32 %v58, 4294901760
    %v156 = vsub.f32 %v58, %v155
    %v157 = vand.u32 %v156, 4294901760
    %v158 = vsub.f32 %v156, %v157
    %v159 = vand.u32 %v158, 4294901760
    %160 = vmatpush.msra.mxu0 %v159
    %v161 = vand.u32 %v56, 4294901760
    %v162 = vsub.f32 %v56, %v161
    %v163 = vand.u32 %v162, 4294901760
    %v164 = vsub.f32 %v162, %v163
    %v165 = vand.u32 %v164, 4294901760
    %166 = vmatpush.msra.mxu0 %v165
    %v167 = vand.u32 %v54, 4294901760
    %v168 = vsub.f32 %v54, %v167
    %v169 = vand.u32 %v168, 4294901760
    %v170 = vsub.f32 %v168, %v169
    %v171 = vand.u32 %v170, 4294901760
    %172 = vmatpush.msra.mxu0 %v171
    %v173 = vand.u32 %v52, 4294901760
    %v174 = vsub.f32 %v52, %v173
    %v175 = vand.u32 %v174, 4294901760
    %v176 = vsub.f32 %v174, %v175
    %v177 = vand.u32 %v176, 4294901760
    %178 = vmatpush.msra.mxu0 %v177
    %v179 = vand.u32 %v50, 4294901760
    %v180 = vsub.f32 %v50, %v179
    %v181 = vand.u32 %v180, 4294901760
    %v182 = vsub.f32 %v180, %v181
    %v183 = vand.u32 %v182, 4294901760
    %184 = vmatpush.msra.mxu0 %v183
    %v185 = vand.u32 %v48, 4294901760
    %v186 = vsub.f32 %v48, %v185
    %v187 = vand.u32 %v186, 4294901760
    %v188 = vsub.f32 %v186, %v187
    %v189 = vand.u32 %v188, 4294901760
    %190 = vmatpush.msra.mxu0 %v189
    %v191 = vand.u32 %v46, 4294901760
    %v192 = vsub.f32 %v46, %v191
    %v193 = vand.u32 %v192, 4294901760
    %v194 = vsub.f32 %v192, %v193
    %v195 = vand.u32 %v194, 4294901760
    %196 = vmatpush.msra.mxu0 %v195
    %v197 = vand.u32 %v44, 4294901760
    %v198 = vsub.f32 %v44, %v197
    %v199 = vand.u32 %v198, 4294901760
    %v200 = vsub.f32 %v198, %v199
    %v201 = vand.u32 %v200, 4294901760
    %202 = vmatpush.msra.mxu0 %v201
    %v203 = vand.u32 %v42, 4294901760
    %v204 = vsub.f32 %v42, %v203
    %v205 = vand.u32 %v204, 4294901760
    %v206 = vsub.f32 %v204, %v205
    %v207 = vand.u32 %v206, 4294901760
    %208 = vmatpush.msra.mxu0 %v207
    %v209 = vand.u32 %v40, 4294901760
    %v210 = vsub.f32 %v40, %v209
    %v211 = vand.u32 %v210, 4294901760
    %v212 = vsub.f32 %v210, %v211
    %v213 = vand.u32 %v212, 4294901760
    %214 = vmatpush.msra.mxu0 %v213
    %v215 = vand.u32 %v38, 4294901760
    %v216 = vsub.f32 %v38, %v215
    %v217 = vand.u32 %v216, 4294901760
    %v218 = vsub.f32 %v216, %v217
    %v219 = vand.u32 %v218, 4294901760
    %220 = vmatpush.msra.mxu0 %v219
    %v221 = vand.u32 %v36, 4294901760
    %v222 = vsub.f32 %v36, %v221
    %v223 = vand.u32 %v222, 4294901760
    %v224 = vsub.f32 %v222, %v223
    %v225 = vand.u32 %v224, 4294901760
    %226 = vmatpush.msra.mxu0 %v225
    %v227 = vand.u32 %v34, 4294901760
    %v228 = vsub.f32 %v34, %v227
    %v229 = vand.u32 %v228, 4294901760
    %v230 = vsub.f32 %v228, %v229
    %v231 = vand.u32 %v230, 4294901760
    %232 = vmatpush.msra.mxu0 %v231
    %v233 = vand.u32 %v32, 4294901760
    %v234 = vsub.f32 %v32, %v233
    %v235 = vand.u32 %v234, 4294901760
    %v236 = vsub.f32 %v234, %v235
    %v237 = vand.u32 %v236, 4294901760
    %238 = vmatpush.msra.mxu0 %v237
    %v239 = vand.u32 %v30, 4294901760
    %240 = vmatmul.f32.gmra.mxu0 %v239
    %v241 = vpop.f32.mrf.mxu0
    %v242 = vadd.f32 %v141, %v241
    %243 = vdwg.mxu0
    %v244 = vand.u32 %v62, 4294901760
    %v245 = vsub.f32 %v62, %v244
    %246 = vmatpush.msra.mxu0 %v245
    %v247 = vand.u32 %v60, 4294901760
    %v248 = vsub.f32 %v60, %v247
    %249 = vmatpush.msra.mxu0 %v248
    %v250 = vand.u32 %v58, 4294901760
    %v251 = vsub.f32 %v58, %v250
    %252 = vmatpush.msra.mxu0 %v251
    %v253 = vand.u32 %v56, 4294901760
    %v254 = vsub.f32 %v56, %v253
    %255 = vmatpush.msra.mxu0 %v254
    %v256 = vand.u32 %v54, 4294901760
    %v257 = vsub.f32 %v54, %v256
    %258 = vmatpush.msra.mxu0 %v257
    %v259 = vand.u32 %v52, 4294901760
    %v260 = vsub.f32 %v52, %v259
    %261 = vmatpush.msra.mxu0 %v260
    %v262 = vand.u32 %v50, 4294901760
    %v263 = vsub.f32 %v50, %v262
    %264 = vmatpush.msra.mxu0 %v263
    %v265 = vand.u32 %v48, 4294901760
    %v266 = vsub.f32 %v48, %v265
    %267 = vmatpush.msra.mxu0 %v266
    %v268 = vand.u32 %v46, 4294901760
    %v269 = vsub.f32 %v46, %v268
    %270 = vmatpush.msra.mxu0 %v269
    %v271 = vand.u32 %v44, 4294901760
    %v272 = vsub.f32 %v44, %v271
    %273 = vmatpush.msra.mxu0 %v272
    %v274 = vand.u32 %v42, 4294901760
    %v275 = vsub.f32 %v42, %v274
    %276 = vmatpush.msra.mxu0 %v275
    %v277 = vand.u32 %v40, 4294901760
    %v278 = vsub.f32 %v40, %v277
    %279 = vmatpush.msra.mxu0 %v278
    %v280 = vand.u32 %v38, 4294901760
    %v281 = vsub.f32 %v38, %v280
    %282 = vmatpush.msra.mxu0 %v281
    %v283 = vand.u32 %v36, 4294901760
    %v284 = vsub.f32 %v36, %v283
    %285 = vmatpush.msra.mxu0 %v284
    %v286 = vand.u32 %v34, 4294901760
    %v287 = vsub.f32 %v34, %v286
    %288 = vmatpush.msra.mxu0 %v287
    %v289 = vand.u32 %v32, 4294901760
    %v290 = vsub.f32 %v32, %v289
    %291 = vmatpush.msra.mxu0 %v290
    %v292 = vand.u32 %v30, 4294901760
    %v293 = vsub.f32 %v30, %v292
    %294 = vmatmul.f32.gmra.mxu0 %v293
    %v295 = vpop.f32.mrf.mxu0
    %v296 = vadd.f32 %v242, %v295
    %297 = vdwg.mxu0
    %v298 = vand.u32 %v62, 4294901760
    %299 = vmatpush.msra.mxu0 %v298
    %v300 = vand.u32 %v60, 4294901760
    %301 = vmatpush.msra.mxu0 %v300
    %v302 = vand.u32 %v58, 4294901760
    %303 = vmatpush.msra.mxu0 %v302
    %v304 = vand.u32 %v56, 4294901760
    %305 = vmatpush.msra.mxu0 %v304
    %v306 = vand.u32 %v54, 4294901760
    %307 = vmatpush.msra.mxu0 %v306
    %v308 = vand.u32 %v52, 4294901760
    %309 = vmatpush.msra.mxu0 %v308
    %v310 = vand.u32 %v50, 4294901760
    %311 = vmatpush.msra.mxu0 %v310
    %v312 = vand.u32 %v48, 4294901760
    %313 = vmatpush.msra.mxu0 %v312
    %v314 = vand.u32 %v46, 4294901760
    %315 = vmatpush.msra.mxu0 %v314
    %v316 = vand.u32 %v44, 4294901760
    %317 = vmatpush.msra.mxu0 %v316
    %v318 = vand.u32 %v42, 4294901760
    %319 = vmatpush.msra.mxu0 %v318
    %v320 = vand.u32 %v40, 4294901760
    %321 = vmatpush.msra.mxu0 %v320
    %v322 = vand.u32 %v38, 4294901760
    %323 = vmatpush.msra.mxu0 %v322
    %v324 = vand.u32 %v36, 4294901760
    %325 = vmatpush.msra.mxu0 %v324
    %v326 = vand.u32 %v34, 4294901760
    %327 = vmatpush.msra.mxu0 %v326
    %v328 = vand.u32 %v32, 4294901760
    %329 = vmatpush.msra.mxu0 %v328
    %v330 = vand.u32 %v30, 4294901760
    %v331 = vsub.f32 %v30, %v330
    %v332 = vand.u32 %v331, 4294901760
    %333 = vmatmul.f32.gmra.mxu0 %v332
    %v334 = vpop.f32.mrf.mxu0
    %v335 = vadd.f32 %v296, %v334
    %336 = vdwg.mxu0
    %v337 = vand.u32 %v62, 4294901760
    %v338 = vsub.f32 %v62, %v337
    %v339 = vand.u32 %v338, 4294901760
    %340 = vmatpush.msra.mxu0 %v339
    %v341 = vand.u32 %v60, 4294901760
    %v342 = vsub.f32 %v60, %v341
    %v343 = vand.u32 %v342, 4294901760
    %344 = vmatpush.msra.mxu0 %v343
    %v345 = vand.u32 %v58, 4294901760
    %v346 = vsub.f32 %v58, %v345
    %v347 = vand.u32 %v346, 4294901760
    %348 = vmatpush.msra.mxu0 %v347
    %v349 = vand.u32 %v56, 4294901760
    %v350 = vsub.f32 %v56, %v349
    %v351 = vand.u32 %v350, 4294901760
    %352 = vmatpush.msra.mxu0 %v351
    %v353 = vand.u32 %v54, 4294901760
    %v354 = vsub.f32 %v54, %v353
    %v355 = vand.u32 %v354, 4294901760
    %356 = vmatpush.msra.mxu0 %v355
    %v357 = vand.u32 %v52, 4294901760
    %v358 = vsub.f32 %v52, %v357
    %v359 = vand.u32 %v358, 4294901760
    %360 = vmatpush.msra.mxu0 %v359
    %v361 = vand.u32 %v50, 4294901760
    %v362 = vsub.f32 %v50, %v361
    %v363 = vand.u32 %v362, 4294901760
    %364 = vmatpush.msra.mxu0 %v363
    %v365 = vand.u32 %v48, 4294901760
    %v366 = vsub.f32 %v48, %v365
    %v367 = vand.u32 %v366, 4294901760
    %368 = vmatpush.msra.mxu0 %v367
    %v369 = vand.u32 %v46, 4294901760
    %v370 = vsub.f32 %v46, %v369
    %v371 = vand.u32 %v370, 4294901760
    %372 = vmatpush.msra.mxu0 %v371
    %v373 = vand.u32 %v44, 4294901760
    %v374 = vsub.f32 %v44, %v373
    %v375 = vand.u32 %v374, 4294901760
    %376 = vmatpush.msra.mxu0 %v375
    %v377 = vand.u32 %v42, 4294901760
    %v378 = vsub.f32 %v42, %v377
    %v379 = vand.u32 %v378, 4294901760
    %380 = vmatpush.msra.mxu0 %v379
    %v381 = vand.u32 %v40, 4294901760
    %v382 = vsub.f32 %v40, %v381
    %v383 = vand.u32 %v382, 4294901760
    %384 = vmatpush.msra.mxu0 %v383
    %v385 = vand.u32 %v38, 4294901760
    %v386 = vsub.f32 %v38, %v385
    %v387 = vand.u32 %v386, 4294901760
    %388 = vmatpush.msra.mxu0 %v387
    %v389 = vand.u32 %v36, 4294901760
    %v390 = vsub.f32 %v36, %v389
    %v391 = vand.u32 %v390, 4294901760
    %392 = vmatpush.msra.mxu0 %v391
    %v393 = vand.u32 %v34, 4294901760
    %v394 = vsub.f32 %v34, %v393
    %v395 = vand.u32 %v394, 4294901760
    %396 = vmatpush.msra.mxu0 %v395
    %v397 = vand.u32 %v32, 4294901760
    %v398 = vsub.f32 %v32, %v397
    %v399 = vand.u32 %v398, 4294901760
    %400 = vmatpush.msra.mxu0 %v399
    %v401 = vand.u32 %v30, 4294901760
    %402 = vmatmul.f32.gmra.mxu0 %v401
    %v403 = vpop.f32.mrf.mxu0
    %v404 = vadd.f32 %v335, %v403
    %405 = vdwg.mxu0
    %v406 = vand.u32 %v62, 4294901760
    %407 = vmatpush.msra.mxu0 %v406
    %v408 = vand.u32 %v60, 4294901760
    %409 = vmatpush.msra.mxu0 %v408
    %v410 = vand.u32 %v58, 4294901760
    %411 = vmatpush.msra.mxu0 %v410
    %v412 = vand.u32 %v56, 4294901760
    %413 = vmatpush.msra.mxu0 %v412
    %v414 = vand.u32 %v54, 4294901760
    %415 = vmatpush.msra.mxu0 %v414
    %v416 = vand.u32 %v52, 4294901760
    %417 = vmatpush.msra.mxu0 %v416
    %v418 = vand.u32 %v50, 4294901760
    %419 = vmatpush.msra.mxu0 %v418
    %v420 = vand.u32 %v48, 4294901760
    %421 = vmatpush.msra.mxu0 %v420
    %v422 = vand.u32 %v46, 4294901760
    %423 = vmatpush.msra.mxu0 %v422
    %v424 = vand.u32 %v44, 4294901760
    %425 = vmatpush.msra.mxu0 %v424
    %v426 = vand.u32 %v42, 4294901760
    %427 = vmatpush.msra.mxu0 %v426
    %v428 = vand.u32 %v40, 4294901760
    %429 = vmatpush.msra.mxu0 %v428
    %v430 = vand.u32 %v38, 4294901760
    %431 = vmatpush.msra.mxu0 %v430
    %v432 = vand.u32 %v36, 4294901760
    %433 = vmatpush.msra.mxu0 %v432
    %v434 = vand.u32 %v34, 4294901760
    %435 = vmatpush.msra.mxu0 %v434
    %v436 = vand.u32 %v32, 4294901760
    %437 = vmatpush.msra.mxu0 %v436
    %v438 = vand.u32 %v30, 4294901760
    %439 = vmatmul.f32.gmra.mxu0 %v438
    %v440 = vpop.f32.mrf.mxu0
    %v441 = vadd.f32 %v404, %v440
    %442 = vdwg.mxu0
    %v443 = vand.u32 %v94, 4294901760
    %444 = vmatpush.msra.mxu0 %v443
    %v445 = vand.u32 %v92, 4294901760
    %446 = vmatpush.msra.mxu0 %v445
    %v447 = vand.u32 %v90, 4294901760
    %448 = vmatpush.msra.mxu0 %v447
    %v449 = vand.u32 %v88, 4294901760
    %450 = vmatpush.msra.mxu0 %v449
    %v451 = vand.u32 %v86, 4294901760
    %452 = vmatpush.msra.mxu0 %v451
    %v453 = vand.u32 %v84, 4294901760
    %454 = vmatpush.msra.mxu0 %v453
    %v455 = vand.u32 %v82, 4294901760
    %456 = vmatpush.msra.mxu0 %v455
    %v457 = vand.u32 %v80, 4294901760
    %458 = vmatpush.msra.mxu0 %v457
    %v459 = vand.u32 %v78, 4294901760
    %460 = vmatpush.msra.mxu0 %v459
    %v461 = vand.u32 %v76, 4294901760
    %462 = vmatpush.msra.mxu0 %v461
    %v463 = vand.u32 %v74, 4294901760
    %464 = vmatpush.msra.mxu0 %v463
    %v465 = vand.u32 %v72, 4294901760
    %466 = vmatpush.msra.mxu0 %v465
    %v467 = vand.u32 %v70, 4294901760
    %468 = vmatpush.msra.mxu0 %v467
    %v469 = vand.u32 %v68, 4294901760
    %470 = vmatpush.msra.mxu0 %v469
    %v471 = vand.u32 %v66, 4294901760
    %472 = vmatpush.msra.mxu0 %v471
    %v473 = vand.u32 %v64, 4294901760
    %474 = vmatpush.msra.mxu0 %v473
    %v475 = vand.u32 %v31, 4294901760
    %v476 = vsub.f32 %v31, %v475
    %v477 = vand.u32 %v476, 4294901760
    %v478 = vsub.f32 %v476, %v477
    %v479 = vand.u32 %v478, 4294901760
    %480 = vmatmul.f32.gmra.mxu0 %v479
    %v481 = vpop.f32.mrf.mxu0
    %v482 = vadd.f32 %v441, %v481
    %483 = vdwg.mxu0
    %v484 = vand.u32 %v94, 4294901760
    %v485 = vsub.f32 %v94, %v484
    %v486 = vand.u32 %v485, 4294901760
    %v487 = vsub.f32 %v485, %v486
    %v488 = vand.u32 %v487, 4294901760
    %489 = vmatpush.msra.mxu0 %v488
    %v490 = vand.u32 %v92, 4294901760
    %v491 = vsub.f32 %v92, %v490
    %v492 = vand.u32 %v491, 4294901760
    %v493 = vsub.f32 %v491, %v492
    %v494 = vand.u32 %v493, 4294901760
    %495 = vmatpush.msra.mxu0 %v494
    %v496 = vand.u32 %v90, 4294901760
    %v497 = vsub.f32 %v90, %v496
    %v498 = vand.u32 %v497, 4294901760
    %v499 = vsub.f32 %v497, %v498
    %v500 = vand.u32 %v499, 4294901760
    %501 = vmatpush.msra.mxu0 %v500
    %v502 = vand.u32 %v88, 4294901760
    %v503 = vsub.f32 %v88, %v502
    %v504 = vand.u32 %v503, 4294901760
    %v505 = vsub.f32 %v503, %v504
    %v506 = vand.u32 %v505, 4294901760
    %507 = vmatpush.msra.mxu0 %v506
    %v508 = vand.u32 %v86, 4294901760
    %v509 = vsub.f32 %v86, %v508
    %v510 = vand.u32 %v509, 4294901760
    %v511 = vsub.f32 %v509, %v510
    %v512 = vand.u32 %v511, 4294901760
    %513 = vmatpush.msra.mxu0 %v512
    %v514 = vand.u32 %v84, 4294901760
    %v515 = vsub.f32 %v84, %v514
    %v516 = vand.u32 %v515, 4294901760
    %v517 = vsub.f32 %v515, %v516
    %v518 = vand.u32 %v517, 4294901760
    %519 = vmatpush.msra.mxu0 %v518
    %v520 = vand.u32 %v82, 4294901760
    %v521 = vsub.f32 %v82, %v520
    %v522 = vand.u32 %v521, 4294901760
    %v523 = vsub.f32 %v521, %v522
    %v524 = vand.u32 %v523, 4294901760
    %525 = vmatpush.msra.mxu0 %v524
    %v526 = vand.u32 %v80, 4294901760
    %v527 = vsub.f32 %v80, %v526
    %v528 = vand.u32 %v527, 4294901760
    %v529 = vsub.f32 %v527, %v528
    %v530 = vand.u32 %v529, 4294901760
    %531 = vmatpush.msra.mxu0 %v530
    %v532 = vand.u32 %v78, 4294901760
    %v533 = vsub.f32 %v78, %v532
    %v534 = vand.u32 %v533, 4294901760
    %v535 = vsub.f32 %v533, %v534
    %v536 = vand.u32 %v535, 4294901760
    %537 = vmatpush.msra.mxu0 %v536
    %v538 = vand.u32 %v76, 4294901760
    %v539 = vsub.f32 %v76, %v538
    %v540 = vand.u32 %v539, 4294901760
    %v541 = vsub.f32 %v539, %v540
    %v542 = vand.u32 %v541, 4294901760
    %543 = vmatpush.msra.mxu0 %v542
    %v544 = vand.u32 %v74, 4294901760
    %v545 = vsub.f32 %v74, %v544
    %v546 = vand.u32 %v545, 4294901760
    %v547 = vsub.f32 %v545, %v546
    %v548 = vand.u32 %v547, 4294901760
    %549 = vmatpush.msra.mxu0 %v548
    %v550 = vand.u32 %v72, 4294901760
    %v551 = vsub.f32 %v72, %v550
    %v552 = vand.u32 %v551, 4294901760
    %v553 = vsub.f32 %v551, %v552
    %v554 = vand.u32 %v553, 4294901760
    %555 = vmatpush.msra.mxu0 %v554
    %v556 = vand.u32 %v70, 4294901760
    %v557 = vsub.f32 %v70, %v556
    %v558 = vand.u32 %v557, 4294901760
    %v559 = vsub.f32 %v557, %v558
    %v560 = vand.u32 %v559, 4294901760
    %561 = vmatpush.msra.mxu0 %v560
    %v562 = vand.u32 %v68, 4294901760
    %v563 = vsub.f32 %v68, %v562
    %v564 = vand.u32 %v563, 4294901760
    %v565 = vsub.f32 %v563, %v564
    %v566 = vand.u32 %v565, 4294901760
    %567 = vmatpush.msra.mxu0 %v566
    %v568 = vand.u32 %v66, 4294901760
    %v569 = vsub.f32 %v66, %v568
    %v570 = vand.u32 %v569, 4294901760
    %v571 = vsub.f32 %v569, %v570
    %v572 = vand.u32 %v571, 4294901760
    %573 = vmatpush.msra.mxu0 %v572
    %v574 = vand.u32 %v64, 4294901760
    %v575 = vsub.f32 %v64, %v574
    %v576 = vand.u32 %v575, 4294901760
    %v577 = vsub.f32 %v575, %v576
    %v578 = vand.u32 %v577, 4294901760
    %579 = vmatpush.msra.mxu0 %v578
    %v580 = vand.u32 %v31, 4294901760
    %581 = vmatmul.f32.gmra.mxu0 %v580
    %v582 = vpop.f32.mrf.mxu0
    %v583 = vadd.f32 %v482, %v582
    %584 = vdwg.mxu0
    %v585 = vand.u32 %v94, 4294901760
    %v586 = vsub.f32 %v94, %v585
    %587 = vmatpush.msra.mxu0 %v586
    %v588 = vand.u32 %v92, 4294901760
    %v589 = vsub.f32 %v92, %v588
    %590 = vmatpush.msra.mxu0 %v589
    %v591 = vand.u32 %v90, 4294901760
    %v592 = vsub.f32 %v90, %v591
    %593 = vmatpush.msra.mxu0 %v592
    %v594 = vand.u32 %v88, 4294901760
    %v595 = vsub.f32 %v88, %v594
    %596 = vmatpush.msra.mxu0 %v595
    %v597 = vand.u32 %v86, 4294901760
    %v598 = vsub.f32 %v86, %v597
    %599 = vmatpush.msra.mxu0 %v598
    %v600 = vand.u32 %v84, 4294901760
    %v601 = vsub.f32 %v84, %v600
    %602 = vmatpush.msra.mxu0 %v601
    %v603 = vand.u32 %v82, 4294901760
    %v604 = vsub.f32 %v82, %v603
    %605 = vmatpush.msra.mxu0 %v604
    %v606 = vand.u32 %v80, 4294901760
    %v607 = vsub.f32 %v80, %v606
    %608 = vmatpush.msra.mxu0 %v607
    %v609 = vand.u32 %v78, 4294901760
    %v610 = vsub.f32 %v78, %v609
    %611 = vmatpush.msra.mxu0 %v610
    %v612 = vand.u32 %v76, 4294901760
    %v613 = vsub.f32 %v76, %v612
    %614 = vmatpush.msra.mxu0 %v613
    %v615 = vand.u32 %v74, 4294901760
    %v616 = vsub.f32 %v74, %v615
    %617 = vmatpush.msra.mxu0 %v616
    %v618 = vand.u32 %v72, 4294901760
    %v619 = vsub.f32 %v72, %v618
    %620 = vmatpush.msra.mxu0 %v619
    %v621 = vand.u32 %v70, 4294901760
    %v622 = vsub.f32 %v70, %v621
    %623 = vmatpush.msra.mxu0 %v622
    %v624 = vand.u32 %v68, 4294901760
    %v625 = vsub.f32 %v68, %v624
    %626 = vmatpush.msra.mxu0 %v625
    %v627 = vand.u32 %v66, 4294901760
    %v628 = vsub.f32 %v66, %v627
    %629 = vmatpush.msra.mxu0 %v628
    %v630 = vand.u32 %v64, 4294901760
    %v631 = vsub.f32 %v64, %v630
    %632 = vmatpush.msra.mxu0 %v631
    %v633 = vand.u32 %v31, 4294901760
    %v634 = vsub.f32 %v31, %v633
    %635 = vmatmul.f32.gmra.mxu0 %v634
    %v636 = vpop.f32.mrf.mxu0
    %v637 = vadd.f32 %v583, %v636
    %638 = vdwg.mxu0
    %v639 = vand.u32 %v94, 4294901760
    %640 = vmatpush.msra.mxu0 %v639
    %v641 = vand.u32 %v92, 4294901760
    %642 = vmatpush.msra.mxu0 %v641
    %v643 = vand.u32 %v90, 4294901760
    %644 = vmatpush.msra.mxu0 %v643
    %v645 = vand.u32 %v88, 4294901760
    %646 = vmatpush.msra.mxu0 %v645
    %v647 = vand.u32 %v86, 4294901760
    %648 = vmatpush.msra.mxu0 %v647
    %v649 = vand.u32 %v84, 4294901760
    %650 = vmatpush.msra.mxu0 %v649
    %v651 = vand.u32 %v82, 4294901760
    %652 = vmatpush.msra.mxu0 %v651
    %v653 = vand.u32 %v80, 4294901760
    %654 = vmatpush.msra.mxu0 %v653
    %v655 = vand.u32 %v78, 4294901760
    %656 = vmatpush.msra.mxu0 %v655
    %v657 = vand.u32 %v76, 4294901760
    %658 = vmatpush.msra.mxu0 %v657
    %v659 = vand.u32 %v74, 4294901760
    %660 = vmatpush.msra.mxu0 %v659
    %v661 = vand.u32 %v72, 4294901760
    %662 = vmatpush.msra.mxu0 %v661
    %v663 = vand.u32 %v70, 4294901760
    %664 = vmatpush.msra.mxu0 %v663
    %v665 = vand.u32 %v68, 4294901760
    %666 = vmatpush.msra.mxu0 %v665
    %v667 = vand.u32 %v66, 4294901760
    %668 = vmatpush.msra.mxu0 %v667
    %v669 = vand.u32 %v64, 4294901760
    %670 = vmatpush.msra.mxu0 %v669
    %v671 = vand.u32 %v31, 4294901760
    %v672 = vsub.f32 %v31, %v671
    %v673 = vand.u32 %v672, 4294901760
    %674 = vmatmul.f32.gmra.mxu0 %v673
    %v675 = vpop.f32.mrf.mxu0
    %v676 = vadd.f32 %v637, %v675
    %677 = vdwg.mxu0
    %v678 = vand.u32 %v94, 4294901760
    %v679 = vsub.f32 %v94, %v678
    %v680 = vand.u32 %v679, 4294901760
    %681 = vmatpush.msra.mxu0 %v680
    %v682 = vand.u32 %v92, 4294901760
    %v683 = vsub.f32 %v92, %v682
    %v684 = vand.u32 %v683, 4294901760
    %685 = vmatpush.msra.mxu0 %v684
    %v686 = vand.u32 %v90, 4294901760
    %v687 = vsub.f32 %v90, %v686
    %v688 = vand.u32 %v687, 4294901760
    %689 = vmatpush.msra.mxu0 %v688
    %v690 = vand.u32 %v88, 4294901760
    %v691 = vsub.f32 %v88, %v690
    %v692 = vand.u32 %v691, 4294901760
    %693 = vmatpush.msra.mxu0 %v692
    %v694 = vand.u32 %v86, 4294901760
    %v695 = vsub.f32 %v86, %v694
    %v696 = vand.u32 %v695, 4294901760
    %697 = vmatpush.msra.mxu0 %v696
    %v698 = vand.u32 %v84, 4294901760
    %v699 = vsub.f32 %v84, %v698
    %v700 = vand.u32 %v699, 4294901760
    %701 = vmatpush.msra.mxu0 %v700
    %v702 = vand.u32 %v82, 4294901760
    %v703 = vsub.f32 %v82, %v702
    %v704 = vand.u32 %v703, 4294901760
    %705 = vmatpush.msra.mxu0 %v704
    %v706 = vand.u32 %v80, 4294901760
    %v707 = vsub.f32 %v80, %v706
    %v708 = vand.u32 %v707, 4294901760
    %709 = vmatpush.msra.mxu0 %v708
    %v710 = vand.u32 %v78, 4294901760
    %v711 = vsub.f32 %v78, %v710
    %v712 = vand.u32 %v711, 4294901760
    %713 = vmatpush.msra.mxu0 %v712
    %v714 = vand.u32 %v76, 4294901760
    %v715 = vsub.f32 %v76, %v714
    %v716 = vand.u32 %v715, 4294901760
    %717 = vmatpush.msra.mxu0 %v716
    %v718 = vand.u32 %v74, 4294901760
    %v719 = vsub.f32 %v74, %v718
    %v720 = vand.u32 %v719, 4294901760
    %721 = vmatpush.msra.mxu0 %v720
    %v722 = vand.u32 %v72, 4294901760
    %v723 = vsub.f32 %v72, %v722
    %v724 = vand.u32 %v723, 4294901760
    %725 = vmatpush.msra.mxu0 %v724
    %v726 = vand.u32 %v70, 4294901760
    %v727 = vsub.f32 %v70, %v726
    %v728 = vand.u32 %v727, 4294901760
    %729 = vmatpush.msra.mxu0 %v728
    %v730 = vand.u32 %v68, 4294901760
    %v731 = vsub.f32 %v68, %v730
    %v732 = vand.u32 %v731, 4294901760
    %733 = vmatpush.msra.mxu0 %v732
    %v734 = vand.u32 %v66, 4294901760
    %v735 = vsub.f32 %v66, %v734
    %v736 = vand.u32 %v735, 4294901760
    %737 = vmatpush.msra.mxu0 %v736
    %v738 = vand.u32 %v64, 4294901760
    %v739 = vsub.f32 %v64, %v738
    %v740 = vand.u32 %v739, 4294901760
    %741 = vmatpush.msra.mxu0 %v740
    %v742 = vand.u32 %v31, 4294901760
    %743 = vmatmul.f32.gmra.mxu0 %v742
    %v744 = vpop.f32.mrf.mxu0
    %v745 = vadd.f32 %v676, %v744
    %746 = vdwg.mxu0
    %v747 = vand.u32 %v94, 4294901760
    %748 = vmatpush.msra.mxu0 %v747
    %v749 = vand.u32 %v92, 4294901760
    %750 = vmatpush.msra.mxu0 %v749
    %v751 = vand.u32 %v90, 4294901760
    %752 = vmatpush.msra.mxu0 %v751
    %v753 = vand.u32 %v88, 4294901760
    %754 = vmatpush.msra.mxu0 %v753
    %v755 = vand.u32 %v86, 4294901760
    %756 = vmatpush.msra.mxu0 %v755
    %v757 = vand.u32 %v84, 4294901760
    %758 = vmatpush.msra.mxu0 %v757
    %v759 = vand.u32 %v82, 4294901760
    %760 = vmatpush.msra.mxu0 %v759
    %v761 = vand.u32 %v80, 4294901760
    %762 = vmatpush.msra.mxu0 %v761
    %v763 = vand.u32 %v78, 4294901760
    %764 = vmatpush.msra.mxu0 %v763
    %v765 = vand.u32 %v76, 4294901760
    %766 = vmatpush.msra.mxu0 %v765
    %v767 = vand.u32 %v74, 4294901760
    %768 = vmatpush.msra.mxu0 %v767
    %v769 = vand.u32 %v72, 4294901760
    %770 = vmatpush.msra.mxu0 %v769
    %v771 = vand.u32 %v70, 4294901760
    %772 = vmatpush.msra.mxu0 %v771
    %v773 = vand.u32 %v68, 4294901760
    %774 = vmatpush.msra.mxu0 %v773
    %v775 = vand.u32 %v66, 4294901760
    %776 = vmatpush.msra.mxu0 %v775
    %v777 = vand.u32 %v64, 4294901760
    %778 = vmatpush.msra.mxu0 %v777
    %v779 = vand.u32 %v31, 4294901760
    %780 = vmatmul.f32.gmra.mxu0 %v779
    %v781 = vpop.f32.mrf.mxu0
    %v782 = vadd.f32 %v745, %v781
    %783 = vdwg.mxu0
    %v784 = vand.u32 %v63, 4294901760
    %785 = vmatpush.msra.mxu0 %v784
    %v786 = vand.u32 %v61, 4294901760
    %787 = vmatpush.msra.mxu0 %v786
    %v788 = vand.u32 %v59, 4294901760
    %789 = vmatpush.msra.mxu0 %v788
    %v790 = vand.u32 %v57, 4294901760
    %791 = vmatpush.msra.mxu0 %v790
    %v792 = vand.u32 %v55, 4294901760
    %793 = vmatpush.msra.mxu0 %v792
    %v794 = vand.u32 %v53, 4294901760
    %795 = vmatpush.msra.mxu0 %v794
    %v796 = vand.u32 %v51, 4294901760
    %797 = vmatpush.msra.mxu0 %v796
    %v798 = vand.u32 %v49, 4294901760
    %799 = vmatpush.msra.mxu0 %v798
    %v800 = vand.u32 %v47, 4294901760
    %801 = vmatpush.msra.mxu0 %v800
    %v802 = vand.u32 %v45, 4294901760
    %803 = vmatpush.msra.mxu0 %v802
    %v804 = vand.u32 %v43, 4294901760
    %805 = vmatpush.msra.mxu0 %v804
    %v806 = vand.u32 %v41, 4294901760
    %807 = vmatpush.msra.mxu0 %v806
    %v808 = vand.u32 %v39, 4294901760
    %809 = vmatpush.msra.mxu0 %v808
    %v810 = vand.u32 %v37, 4294901760
    %811 = vmatpush.msra.mxu0 %v810
    %v812 = vand.u32 %v35, 4294901760
    %813 = vmatpush.msra.mxu0 %v812
    %v814 = vand.u32 %v33, 4294901760
    %815 = vmatpush.msra.mxu0 %v814
    %v816 = vand.u32 %v30, 4294901760
    %v817 = vsub.f32 %v30, %v816
    %v818 = vand.u32 %v817, 4294901760
    %v819 = vsub.f32 %v817, %v818
    %v820 = vand.u32 %v819, 4294901760
    %821 = vmatmul.f32.gmra.mxu0 %v820
    %v822 = vpop.f32.mrf.mxu0
    %v823 = vadd.f32 %v99, %v822
    %824 = vdwg.mxu0
    %v825 = vand.u32 %v63, 4294901760
    %v826 = vsub.f32 %v63, %v825
    %v827 = vand.u32 %v826, 4294901760
    %v828 = vsub.f32 %v826, %v827
    %v829 = vand.u32 %v828, 4294901760
    %830 = vmatpush.msra.mxu0 %v829
    %v831 = vand.u32 %v61, 4294901760
    %v832 = vsub.f32 %v61, %v831
    %v833 = vand.u32 %v832, 4294901760
    %v834 = vsub.f32 %v832, %v833
    %v835 = vand.u32 %v834, 4294901760
    %836 = vmatpush.msra.mxu0 %v835
    %v837 = vand.u32 %v59, 4294901760
    %v838 = vsub.f32 %v59, %v837
    %v839 = vand.u32 %v838, 4294901760
    %v840 = vsub.f32 %v838, %v839
    %v841 = vand.u32 %v840, 4294901760
    %842 = vmatpush.msra.mxu0 %v841
    %v843 = vand.u32 %v57, 4294901760
    %v844 = vsub.f32 %v57, %v843
    %v845 = vand.u32 %v844, 4294901760
    %v846 = vsub.f32 %v844, %v845
    %v847 = vand.u32 %v846, 4294901760
    %848 = vmatpush.msra.mxu0 %v847
    %v849 = vand.u32 %v55, 4294901760
    %v850 = vsub.f32 %v55, %v849
    %v851 = vand.u32 %v850, 4294901760
    %v852 = vsub.f32 %v850, %v851
    %v853 = vand.u32 %v852, 4294901760
    %854 = vmatpush.msra.mxu0 %v853
    %v855 = vand.u32 %v53, 4294901760
    %v856 = vsub.f32 %v53, %v855
    %v857 = vand.u32 %v856, 4294901760
    %v858 = vsub.f32 %v856, %v857
    %v859 = vand.u32 %v858, 4294901760
    %860 = vmatpush.msra.mxu0 %v859
    %v861 = vand.u32 %v51, 4294901760
    %v862 = vsub.f32 %v51, %v861
    %v863 = vand.u32 %v862, 4294901760
    %v864 = vsub.f32 %v862, %v863
    %v865 = vand.u32 %v864, 4294901760
    %866 = vmatpush.msra.mxu0 %v865
    %v867 = vand.u32 %v49, 4294901760
    %v868 = vsub.f32 %v49, %v867
    %v869 = vand.u32 %v868, 4294901760
    %v870 = vsub.f32 %v868, %v869
    %v871 = vand.u32 %v870, 4294901760
    %872 = vmatpush.msra.mxu0 %v871
    %v873 = vand.u32 %v47, 4294901760
    %v874 = vsub.f32 %v47, %v873
    %v875 = vand.u32 %v874, 4294901760
    %v876 = vsub.f32 %v874, %v875
    %v877 = vand.u32 %v876, 4294901760
    %878 = vmatpush.msra.mxu0 %v877
    %v879 = vand.u32 %v45, 4294901760
    %v880 = vsub.f32 %v45, %v879
    %v881 = vand.u32 %v880, 4294901760
    %v882 = vsub.f32 %v880, %v881
    %v883 = vand.u32 %v882, 4294901760
    %884 = vmatpush.msra.mxu0 %v883
    %v885 = vand.u32 %v43, 4294901760
    %v886 = vsub.f32 %v43, %v885
    %v887 = vand.u32 %v886, 4294901760
    %v888 = vsub.f32 %v886, %v887
    %v889 = vand.u32 %v888, 4294901760
    %890 = vmatpush.msra.mxu0 %v889
    %v891 = vand.u32 %v41, 4294901760
    %v892 = vsub.f32 %v41, %v891
    %v893 = vand.u32 %v892, 4294901760
    %v894 = vsub.f32 %v892, %v893
    %v895 = vand.u32 %v894, 4294901760
    %896 = vmatpush.msra.mxu0 %v895
    %v897 = vand.u32 %v39, 4294901760
    %v898 = vsub.f32 %v39, %v897
    %v899 = vand.u32 %v898, 4294901760
    %v900 = vsub.f32 %v898, %v899
    %v901 = vand.u32 %v900, 4294901760
    %902 = vmatpush.msra.mxu0 %v901
    %v903 = vand.u32 %v37, 4294901760
    %v904 = vsub.f32 %v37, %v903
    %v905 = vand.u32 %v904, 4294901760
    %v906 = vsub.f32 %v904, %v905
    %v907 = vand.u32 %v906, 4294901760
    %908 = vmatpush.msra.mxu0 %v907
    %v909 = vand.u32 %v35, 4294901760
    %v910 = vsub.f32 %v35, %v909
    %v911 = vand.u32 %v910, 4294901760
    %v912 = vsub.f32 %v910, %v911
    %v913 = vand.u32 %v912, 4294901760
    %914 = vmatpush.msra.mxu0 %v913
    %v915 = vand.u32 %v33, 4294901760
    %v916 = vsub.f32 %v33, %v915
    %v917 = vand.u32 %v916, 4294901760
    %v918 = vsub.f32 %v916, %v917
    %v919 = vand.u32 %v918, 4294901760
    %920 = vmatpush.msra.mxu0 %v919
    %v921 = vand.u32 %v30, 4294901760
    %922 = vmatmul.f32.gmra.mxu0 %v921
    %v923 = vpop.f32.mrf.mxu0
    %v924 = vadd.f32 %v823, %v923
    %925 = vdwg.mxu0
    %v926 = vand.u32 %v63, 4294901760
    %v927 = vsub.f32 %v63, %v926
    %928 = vmatpush.msra.mxu0 %v927
    %v929 = vand.u32 %v61, 4294901760
    %v930 = vsub.f32 %v61, %v929
    %931 = vmatpush.msra.mxu0 %v930
    %v932 = vand.u32 %v59, 4294901760
    %v933 = vsub.f32 %v59, %v932
    %934 = vmatpush.msra.mxu0 %v933
    %v935 = vand.u32 %v57, 4294901760
    %v936 = vsub.f32 %v57, %v935
    %937 = vmatpush.msra.mxu0 %v936
    %v938 = vand.u32 %v55, 4294901760
    %v939 = vsub.f32 %v55, %v938
    %940 = vmatpush.msra.mxu0 %v939
    %v941 = vand.u32 %v53, 4294901760
    %v942 = vsub.f32 %v53, %v941
    %943 = vmatpush.msra.mxu0 %v942
    %v944 = vand.u32 %v51, 4294901760
    %v945 = vsub.f32 %v51, %v944
    %946 = vmatpush.msra.mxu0 %v945
    %v947 = vand.u32 %v49, 4294901760
    %v948 = vsub.f32 %v49, %v947
    %949 = vmatpush.msra.mxu0 %v948
    %v950 = vand.u32 %v47, 4294901760
    %v951 = vsub.f32 %v47, %v950
    %952 = vmatpush.msra.mxu0 %v951
    %v953 = vand.u32 %v45, 4294901760
    %v954 = vsub.f32 %v45, %v953
    %955 = vmatpush.msra.mxu0 %v954
    %v956 = vand.u32 %v43, 4294901760
    %v957 = vsub.f32 %v43, %v956
    %958 = vmatpush.msra.mxu0 %v957
    %v959 = vand.u32 %v41, 4294901760
    %v960 = vsub.f32 %v41, %v959
    %961 = vmatpush.msra.mxu0 %v960
    %v962 = vand.u32 %v39, 4294901760
    %v963 = vsub.f32 %v39, %v962
    %964 = vmatpush.msra.mxu0 %v963
    %v965 = vand.u32 %v37, 4294901760
    %v966 = vsub.f32 %v37, %v965
    %967 = vmatpush.msra.mxu0 %v966
    %v968 = vand.u32 %v35, 4294901760
    %v969 = vsub.f32 %v35, %v968
    %970 = vmatpush.msra.mxu0 %v969
    %v971 = vand.u32 %v33, 4294901760
    %v972 = vsub.f32 %v33, %v971
    %973 = vmatpush.msra.mxu0 %v972
    %v974 = vand.u32 %v30, 4294901760
    %v975 = vsub.f32 %v30, %v974
    %976 = vmatmul.f32.gmra.mxu0 %v975
    %v977 = vpop.f32.mrf.mxu0
    %v978 = vadd.f32 %v924, %v977
    %979 = vdwg.mxu0
    %v980 = vand.u32 %v63, 4294901760
    %981 = vmatpush.msra.mxu0 %v980
    %v982 = vand.u32 %v61, 4294901760
    %983 = vmatpush.msra.mxu0 %v982
    %v984 = vand.u32 %v59, 4294901760
    %985 = vmatpush.msra.mxu0 %v984
    %v986 = vand.u32 %v57, 4294901760
    %987 = vmatpush.msra.mxu0 %v986
    %v988 = vand.u32 %v55, 4294901760
    %989 = vmatpush.msra.mxu0 %v988
    %v990 = vand.u32 %v53, 4294901760
    %991 = vmatpush.msra.mxu0 %v990
    %v992 = vand.u32 %v51, 4294901760
    %993 = vmatpush.msra.mxu0 %v992
    %v994 = vand.u32 %v49, 4294901760
    %995 = vmatpush.msra.mxu0 %v994
    %v996 = vand.u32 %v47, 4294901760
    %997 = vmatpush.msra.mxu0 %v996
    %v998 = vand.u32 %v45, 4294901760
    %999 = vmatpush.msra.mxu0 %v998
    %v1000 = vand.u32 %v43, 4294901760
    %1001 = vmatpush.msra.mxu0 %v1000
    %v1002 = vand.u32 %v41, 4294901760
    %1003 = vmatpush.msra.mxu0 %v1002
    %v1004 = vand.u32 %v39, 4294901760
    %1005 = vmatpush.msra.mxu0 %v1004
    %v1006 = vand.u32 %v37, 4294901760
    %1007 = vmatpush.msra.mxu0 %v1006
    %v1008 = vand.u32 %v35, 4294901760
    %1009 = vmatpush.msra.mxu0 %v1008
    %v1010 = vand.u32 %v33, 4294901760
    %1011 = vmatpush.msra.mxu0 %v1010
    %v1012 = vand.u32 %v30, 4294901760
    %v1013 = vsub.f32 %v30, %v1012
    %v1014 = vand.u32 %v1013, 4294901760
    %1015 = vmatmul.f32.gmra.mxu0 %v1014
    %v1016 = vpop.f32.mrf.mxu0
    %v1017 = vadd.f32 %v978, %v1016
    %1018 = vdwg.mxu0
    %v1019 = vand.u32 %v63, 4294901760
    %v1020 = vsub.f32 %v63, %v1019
    %v1021 = vand.u32 %v1020, 4294901760
    %1022 = vmatpush.msra.mxu0 %v1021
    %v1023 = vand.u32 %v61, 4294901760
    %v1024 = vsub.f32 %v61, %v1023
    %v1025 = vand.u32 %v1024, 4294901760
    %1026 = vmatpush.msra.mxu0 %v1025
    %v1027 = vand.u32 %v59, 4294901760
    %v1028 = vsub.f32 %v59, %v1027
    %v1029 = vand.u32 %v1028, 4294901760
    %1030 = vmatpush.msra.mxu0 %v1029
    %v1031 = vand.u32 %v57, 4294901760
    %v1032 = vsub.f32 %v57, %v1031
    %v1033 = vand.u32 %v1032, 4294901760
    %1034 = vmatpush.msra.mxu0 %v1033
    %v1035 = vand.u32 %v55, 4294901760
    %v1036 = vsub.f32 %v55, %v1035
    %v1037 = vand.u32 %v1036, 4294901760
    %1038 = vmatpush.msra.mxu0 %v1037
    %v1039 = vand.u32 %v53, 4294901760
    %v1040 = vsub.f32 %v53, %v1039
    %v1041 = vand.u32 %v1040, 4294901760
    %1042 = vmatpush.msra.mxu0 %v1041
    %v1043 = vand.u32 %v51, 4294901760
    %v1044 = vsub.f32 %v51, %v1043
    %v1045 = vand.u32 %v1044, 4294901760
    %1046 = vmatpush.msra.mxu0 %v1045
    %v1047 = vand.u32 %v49, 4294901760
    %v1048 = vsub.f32 %v49, %v1047
    %v1049 = vand.u32 %v1048, 4294901760
    %1050 = vmatpush.msra.mxu0 %v1049
    %v1051 = vand.u32 %v47, 4294901760
    %v1052 = vsub.f32 %v47, %v1051
    %v1053 = vand.u32 %v1052, 4294901760
    %1054 = vmatpush.msra.mxu0 %v1053
    %v1055 = vand.u32 %v45, 4294901760
    %v1056 = vsub.f32 %v45, %v1055
    %v1057 = vand.u32 %v1056, 4294901760
    %1058 = vmatpush.msra.mxu0 %v1057
    %v1059 = vand.u32 %v43, 4294901760
    %v1060 = vsub.f32 %v43, %v1059
    %v1061 = vand.u32 %v1060, 4294901760
    %1062 = vmatpush.msra.mxu0 %v1061
    %v1063 = vand.u32 %v41, 4294901760
    %v1064 = vsub.f32 %v41, %v1063
    %v1065 = vand.u32 %v1064, 4294901760
    %1066 = vmatpush.msra.mxu0 %v1065
    %v1067 = vand.u32 %v39, 4294901760
    %v1068 = vsub.f32 %v39, %v1067
    %v1069 = vand.u32 %v1068, 4294901760
    %1070 = vmatpush.msra.mxu0 %v1069
    %v1071 = vand.u32 %v37, 4294901760
    %v1072 = vsub.f32 %v37, %v1071
    %v1073 = vand.u32 %v1072, 4294901760
    %1074 = vmatpush.msra.mxu0 %v1073
    %v1075 = vand.u32 %v35, 4294901760
    %v1076 = vsub.f32 %v35, %v1075
    %v1077 = vand.u32 %v1076, 4294901760
    %1078 = vmatpush.msra.mxu0 %v1077
    %v1079 = vand.u32 %v33, 4294901760
    %v1080 = vsub.f32 %v33, %v1079
    %v1081 = vand.u32 %v1080, 4294901760
    %1082 = vmatpush.msra.mxu0 %v1081
    %v1083 = vand.u32 %v30, 4294901760
    %1084 = vmatmul.f32.gmra.mxu0 %v1083
    %v1085 = vpop.f32.mrf.mxu0
    %v1086 = vadd.f32 %v1017, %v1085
    %1087 = vdwg.mxu0
    %v1088 = vand.u32 %v63, 4294901760
    %1089 = vmatpush.msra.mxu0 %v1088
    %v1090 = vand.u32 %v61, 4294901760
    %1091 = vmatpush.msra.mxu0 %v1090
    %v1092 = vand.u32 %v59, 4294901760
    %1093 = vmatpush.msra.mxu0 %v1092
    %v1094 = vand.u32 %v57, 4294901760
    %1095 = vmatpush.msra.mxu0 %v1094
    %v1096 = vand.u32 %v55, 4294901760
    %1097 = vmatpush.msra.mxu0 %v1096
    %v1098 = vand.u32 %v53, 4294901760
    %1099 = vmatpush.msra.mxu0 %v1098
    %v1100 = vand.u32 %v51, 4294901760
    %1101 = vmatpush.msra.mxu0 %v1100
    %v1102 = vand.u32 %v49, 4294901760
    %1103 = vmatpush.msra.mxu0 %v1102
    %v1104 = vand.u32 %v47, 4294901760
    %1105 = vmatpush.msra.mxu0 %v1104
    %v1106 = vand.u32 %v45, 4294901760
    %1107 = vmatpush.msra.mxu0 %v1106
    %v1108 = vand.u32 %v43, 4294901760
    %1109 = vmatpush.msra.mxu0 %v1108
    %v1110 = vand.u32 %v41, 4294901760
    %1111 = vmatpush.msra.mxu0 %v1110
    %v1112 = vand.u32 %v39, 4294901760
    %1113 = vmatpush.msra.mxu0 %v1112
    %v1114 = vand.u32 %v37, 4294901760
    %1115 = vmatpush.msra.mxu0 %v1114
    %v1116 = vand.u32 %v35, 4294901760
    %1117 = vmatpush.msra.mxu0 %v1116
    %v1118 = vand.u32 %v33, 4294901760
    %1119 = vmatpush.msra.mxu0 %v1118
    %v1120 = vand.u32 %v30, 4294901760
    %1121 = vmatmul.f32.gmra.mxu0 %v1120
    %v1122 = vpop.f32.mrf.mxu0
    %v1123 = vadd.f32 %v1086, %v1122
    %1124 = vdwg.mxu0
    %v1125 = vand.u32 %v95, 4294901760
    %1126 = vmatpush.msra.mxu0 %v1125
    %v1127 = vand.u32 %v93, 4294901760
    %1128 = vmatpush.msra.mxu0 %v1127
    %v1129 = vand.u32 %v91, 4294901760
    %1130 = vmatpush.msra.mxu0 %v1129
    %v1131 = vand.u32 %v89, 4294901760
    %1132 = vmatpush.msra.mxu0 %v1131
    %v1133 = vand.u32 %v87, 4294901760
    %1134 = vmatpush.msra.mxu0 %v1133
    %v1135 = vand.u32 %v85, 4294901760
    %1136 = vmatpush.msra.mxu0 %v1135
    %v1137 = vand.u32 %v83, 4294901760
    %1138 = vmatpush.msra.mxu0 %v1137
    %v1139 = vand.u32 %v81, 4294901760
    %1140 = vmatpush.msra.mxu0 %v1139
    %v1141 = vand.u32 %v79, 4294901760
    %1142 = vmatpush.msra.mxu0 %v1141
    %v1143 = vand.u32 %v77, 4294901760
    %1144 = vmatpush.msra.mxu0 %v1143
    %v1145 = vand.u32 %v75, 4294901760
    %1146 = vmatpush.msra.mxu0 %v1145
    %v1147 = vand.u32 %v73, 4294901760
    %1148 = vmatpush.msra.mxu0 %v1147
    %v1149 = vand.u32 %v71, 4294901760
    %1150 = vmatpush.msra.mxu0 %v1149
    %v1151 = vand.u32 %v69, 4294901760
    %1152 = vmatpush.msra.mxu0 %v1151
    %v1153 = vand.u32 %v67, 4294901760
    %1154 = vmatpush.msra.mxu0 %v1153
    %v1155 = vand.u32 %v65, 4294901760
    %1156 = vmatpush.msra.mxu0 %v1155
    %v1157 = vand.u32 %v31, 4294901760
    %v1158 = vsub.f32 %v31, %v1157
    %v1159 = vand.u32 %v1158, 4294901760
    %v1160 = vsub.f32 %v1158, %v1159
    %v1161 = vand.u32 %v1160, 4294901760
    %1162 = vmatmul.f32.gmra.mxu0 %v1161
    %v1163 = vpop.f32.mrf.mxu0
    %v1164 = vadd.f32 %v1123, %v1163
    %1165 = vdwg.mxu0
    %v1166 = vand.u32 %v95, 4294901760
    %v1167 = vsub.f32 %v95, %v1166
    %v1168 = vand.u32 %v1167, 4294901760
    %v1169 = vsub.f32 %v1167, %v1168
    %v1170 = vand.u32 %v1169, 4294901760
    %1171 = vmatpush.msra.mxu0 %v1170
    %v1172 = vand.u32 %v93, 4294901760
    %v1173 = vsub.f32 %v93, %v1172
    %v1174 = vand.u32 %v1173, 4294901760
    %v1175 = vsub.f32 %v1173, %v1174
    %v1176 = vand.u32 %v1175, 4294901760
    %1177 = vmatpush.msra.mxu0 %v1176
    %v1178 = vand.u32 %v91, 4294901760
    %v1179 = vsub.f32 %v91, %v1178
    %v1180 = vand.u32 %v1179, 4294901760
    %v1181 = vsub.f32 %v1179, %v1180
    %v1182 = vand.u32 %v1181, 4294901760
    %1183 = vmatpush.msra.mxu0 %v1182
    %v1184 = vand.u32 %v89, 4294901760
    %v1185 = vsub.f32 %v89, %v1184
    %v1186 = vand.u32 %v1185, 4294901760
    %v1187 = vsub.f32 %v1185, %v1186
    %v1188 = vand.u32 %v1187, 4294901760
    %1189 = vmatpush.msra.mxu0 %v1188
    %v1190 = vand.u32 %v87, 4294901760
    %v1191 = vsub.f32 %v87, %v1190
    %v1192 = vand.u32 %v1191, 4294901760
    %v1193 = vsub.f32 %v1191, %v1192
    %v1194 = vand.u32 %v1193, 4294901760
    %1195 = vmatpush.msra.mxu0 %v1194
    %v1196 = vand.u32 %v85, 4294901760
    %v1197 = vsub.f32 %v85, %v1196
    %v1198 = vand.u32 %v1197, 4294901760
    %v1199 = vsub.f32 %v1197, %v1198
    %v1200 = vand.u32 %v1199, 4294901760
    %1201 = vmatpush.msra.mxu0 %v1200
    %v1202 = vand.u32 %v83, 4294901760
    %v1203 = vsub.f32 %v83, %v1202
    %v1204 = vand.u32 %v1203, 4294901760
    %v1205 = vsub.f32 %v1203, %v1204
    %v1206 = vand.u32 %v1205, 4294901760
    %1207 = vmatpush.msra.mxu0 %v1206
    %v1208 = vand.u32 %v81, 4294901760
    %v1209 = vsub.f32 %v81, %v1208
    %v1210 = vand.u32 %v1209, 4294901760
    %v1211 = vsub.f32 %v1209, %v1210
    %v1212 = vand.u32 %v1211, 4294901760
    %1213 = vmatpush.msra.mxu0 %v1212
    %v1214 = vand.u32 %v79, 4294901760
    %v1215 = vsub.f32 %v79, %v1214
    %v1216 = vand.u32 %v1215, 4294901760
    %v1217 = vsub.f32 %v1215, %v1216
    %v1218 = vand.u32 %v1217, 4294901760
    %1219 = vmatpush.msra.mxu0 %v1218
    %v1220 = vand.u32 %v77, 4294901760
    %v1221 = vsub.f32 %v77, %v1220
    %v1222 = vand.u32 %v1221, 4294901760
    %v1223 = vsub.f32 %v1221, %v1222
    %v1224 = vand.u32 %v1223, 4294901760
    %1225 = vmatpush.msra.mxu0 %v1224
    %v1226 = vand.u32 %v75, 4294901760
    %v1227 = vsub.f32 %v75, %v1226
    %v1228 = vand.u32 %v1227, 4294901760
    %v1229 = vsub.f32 %v1227, %v1228
    %v1230 = vand.u32 %v1229, 4294901760
    %1231 = vmatpush.msra.mxu0 %v1230
    %v1232 = vand.u32 %v73, 4294901760
    %v1233 = vsub.f32 %v73, %v1232
    %v1234 = vand.u32 %v1233, 4294901760
    %v1235 = vsub.f32 %v1233, %v1234
    %v1236 = vand.u32 %v1235, 4294901760
    %1237 = vmatpush.msra.mxu0 %v1236
    %v1238 = vand.u32 %v71, 4294901760
    %v1239 = vsub.f32 %v71, %v1238
    %v1240 = vand.u32 %v1239, 4294901760
    %v1241 = vsub.f32 %v1239, %v1240
    %v1242 = vand.u32 %v1241, 4294901760
    %1243 = vmatpush.msra.mxu0 %v1242
    %v1244 = vand.u32 %v69, 4294901760
    %v1245 = vsub.f32 %v69, %v1244
    %v1246 = vand.u32 %v1245, 4294901760
    %v1247 = vsub.f32 %v1245, %v1246
    %v1248 = vand.u32 %v1247, 4294901760
    %1249 = vmatpush.msra.mxu0 %v1248
    %v1250 = vand.u32 %v67, 4294901760
    %v1251 = vsub.f32 %v67, %v1250
    %v1252 = vand.u32 %v1251, 4294901760
    %v1253 = vsub.f32 %v1251, %v1252
    %v1254 = vand.u32 %v1253, 4294901760
    %1255 = vmatpush.msra.mxu0 %v1254
    %v1256 = vand.u32 %v65, 4294901760
    %v1257 = vsub.f32 %v65, %v1256
    %v1258 = vand.u32 %v1257, 4294901760
    %v1259 = vsub.f32 %v1257, %v1258
    %v1260 = vand.u32 %v1259, 4294901760
    %1261 = vmatpush.msra.mxu0 %v1260
    %v1262 = vand.u32 %v31, 4294901760
    %1263 = vmatmul.f32.gmra.mxu0 %v1262
    %v1264 = vpop.f32.mrf.mxu0
    %v1265 = vadd.f32 %v1164, %v1264
    %1266 = vdwg.mxu0
    %v1267 = vand.u32 %v95, 4294901760
    %v1268 = vsub.f32 %v95, %v1267
    %1269 = vmatpush.msra.mxu0 %v1268
    %v1270 = vand.u32 %v93, 4294901760
    %v1271 = vsub.f32 %v93, %v1270
    %1272 = vmatpush.msra.mxu0 %v1271
    %v1273 = vand.u32 %v91, 4294901760
    %v1274 = vsub.f32 %v91, %v1273
    %1275 = vmatpush.msra.mxu0 %v1274
    %v1276 = vand.u32 %v89, 4294901760
    %v1277 = vsub.f32 %v89, %v1276
    %1278 = vmatpush.msra.mxu0 %v1277
    %v1279 = vand.u32 %v87, 4294901760
    %v1280 = vsub.f32 %v87, %v1279
    %1281 = vmatpush.msra.mxu0 %v1280
    %v1282 = vand.u32 %v85, 4294901760
    %v1283 = vsub.f32 %v85, %v1282
    %1284 = vmatpush.msra.mxu0 %v1283
    %v1285 = vand.u32 %v83, 4294901760
    %v1286 = vsub.f32 %v83, %v1285
    %1287 = vmatpush.msra.mxu0 %v1286
    %v1288 = vand.u32 %v81, 4294901760
    %v1289 = vsub.f32 %v81, %v1288
    %1290 = vmatpush.msra.mxu0 %v1289
    %v1291 = vand.u32 %v79, 4294901760
    %v1292 = vsub.f32 %v79, %v1291
    %1293 = vmatpush.msra.mxu0 %v1292
    %v1294 = vand.u32 %v77, 4294901760
    %v1295 = vsub.f32 %v77, %v1294
    %1296 = vmatpush.msra.mxu0 %v1295
    %v1297 = vand.u32 %v75, 4294901760
    %v1298 = vsub.f32 %v75, %v1297
    %1299 = vmatpush.msra.mxu0 %v1298
    %v1300 = vand.u32 %v73, 4294901760
    %v1301 = vsub.f32 %v73, %v1300
    %1302 = vmatpush.msra.mxu0 %v1301
    %v1303 = vand.u32 %v71, 4294901760
    %v1304 = vsub.f32 %v71, %v1303
    %1305 = vmatpush.msra.mxu0 %v1304
    %v1306 = vand.u32 %v69, 4294901760
    %v1307 = vsub.f32 %v69, %v1306
    %1308 = vmatpush.msra.mxu0 %v1307
    %v1309 = vand.u32 %v67, 4294901760
    %v1310 = vsub.f32 %v67, %v1309
    %1311 = vmatpush.msra.mxu0 %v1310
    %v1312 = vand.u32 %v65, 4294901760
    %v1313 = vsub.f32 %v65, %v1312
    %1314 = vmatpush.msra.mxu0 %v1313
    %v1315 = vand.u32 %v31, 4294901760
    %v1316 = vsub.f32 %v31, %v1315
    %1317 = vmatmul.f32.gmra.mxu0 %v1316
    %v1318 = vpop.f32.mrf.mxu0
    %v1319 = vadd.f32 %v1265, %v1318
    %1320 = vdwg.mxu0
    %v1321 = vand.u32 %v95, 4294901760
    %1322 = vmatpush.msra.mxu0 %v1321
    %v1323 = vand.u32 %v93, 4294901760
    %1324 = vmatpush.msra.mxu0 %v1323
    %v1325 = vand.u32 %v91, 4294901760
    %1326 = vmatpush.msra.mxu0 %v1325
    %v1327 = vand.u32 %v89, 4294901760
    %1328 = vmatpush.msra.mxu0 %v1327
    %v1329 = vand.u32 %v87, 4294901760
    %1330 = vmatpush.msra.mxu0 %v1329
    %v1331 = vand.u32 %v85, 4294901760
    %1332 = vmatpush.msra.mxu0 %v1331
    %v1333 = vand.u32 %v83, 4294901760
    %1334 = vmatpush.msra.mxu0 %v1333
    %v1335 = vand.u32 %v81, 4294901760
    %1336 = vmatpush.msra.mxu0 %v1335
    %v1337 = vand.u32 %v79, 4294901760
    %1338 = vmatpush.msra.mxu0 %v1337
    %v1339 = vand.u32 %v77, 4294901760
    %1340 = vmatpush.msra.mxu0 %v1339
    %v1341 = vand.u32 %v75, 4294901760
    %1342 = vmatpush.msra.mxu0 %v1341
    %v1343 = vand.u32 %v73, 4294901760
    %1344 = vmatpush.msra.mxu0 %v1343
    %v1345 = vand.u32 %v71, 4294901760
    %1346 = vmatpush.msra.mxu0 %v1345
    %v1347 = vand.u32 %v69, 4294901760
    %1348 = vmatpush.msra.mxu0 %v1347
    %v1349 = vand.u32 %v67, 4294901760
    %1350 = vmatpush.msra.mxu0 %v1349
    %v1351 = vand.u32 %v65, 4294901760
    %1352 = vmatpush.msra.mxu0 %v1351
    %v1353 = vand.u32 %v31, 4294901760
    %v1354 = vsub.f32 %v31, %v1353
    %v1355 = vand.u32 %v1354, 4294901760
    %1356 = vmatmul.f32.gmra.mxu0 %v1355
    %v1357 = vpop.f32.mrf.mxu0
    %v1358 = vadd.f32 %v1319, %v1357
    %1359 = vdwg.mxu0
    %v1360 = vand.u32 %v95, 4294901760
    %v1361 = vsub.f32 %v95, %v1360
    %v1362 = vand.u32 %v1361, 4294901760
    %1363 = vmatpush.msra.mxu0 %v1362
    %v1364 = vand.u32 %v93, 4294901760
    %v1365 = vsub.f32 %v93, %v1364
    %v1366 = vand.u32 %v1365, 4294901760
    %1367 = vmatpush.msra.mxu0 %v1366
    %v1368 = vand.u32 %v91, 4294901760
    %v1369 = vsub.f32 %v91, %v1368
    %v1370 = vand.u32 %v1369, 4294901760
    %1371 = vmatpush.msra.mxu0 %v1370
    %v1372 = vand.u32 %v89, 4294901760
    %v1373 = vsub.f32 %v89, %v1372
    %v1374 = vand.u32 %v1373, 4294901760
    %1375 = vmatpush.msra.mxu0 %v1374
    %v1376 = vand.u32 %v87, 4294901760
    %v1377 = vsub.f32 %v87, %v1376
    %v1378 = vand.u32 %v1377, 4294901760
    %1379 = vmatpush.msra.mxu0 %v1378
    %v1380 = vand.u32 %v85, 4294901760
    %v1381 = vsub.f32 %v85, %v1380
    %v1382 = vand.u32 %v1381, 4294901760
    %1383 = vmatpush.msra.mxu0 %v1382
    %v1384 = vand.u32 %v83, 4294901760
    %v1385 = vsub.f32 %v83, %v1384
    %v1386 = vand.u32 %v1385, 4294901760
    %1387 = vmatpush.msra.mxu0 %v1386
    %v1388 = vand.u32 %v81, 4294901760
    %v1389 = vsub.f32 %v81, %v1388
    %v1390 = vand.u32 %v1389, 4294901760
    %1391 = vmatpush.msra.mxu0 %v1390
    %v1392 = vand.u32 %v79, 4294901760
    %v1393 = vsub.f32 %v79, %v1392
    %v1394 = vand.u32 %v1393, 4294901760
    %1395 = vmatpush.msra.mxu0 %v1394
    %v1396 = vand.u32 %v77, 4294901760
    %v1397 = vsub.f32 %v77, %v1396
    %v1398 = vand.u32 %v1397, 4294901760
    %1399 = vmatpush.msra.mxu0 %v1398
    %v1400 = vand.u32 %v75, 4294901760
    %v1401 = vsub.f32 %v75, %v1400
    %v1402 = vand.u32 %v1401, 4294901760
    %1403 = vmatpush.msra.mxu0 %v1402
    %v1404 = vand.u32 %v73, 4294901760
    %v1405 = vsub.f32 %v73, %v1404
    %v1406 = vand.u32 %v1405, 4294901760
    %1407 = vmatpush.msra.mxu0 %v1406
    %v1408 = vand.u32 %v71, 4294901760
    %v1409 = vsub.f32 %v71, %v1408
    %v1410 = vand.u32 %v1409, 4294901760
    %1411 = vmatpush.msra.mxu0 %v1410
    %v1412 = vand.u32 %v69, 4294901760
    %v1413 = vsub.f32 %v69, %v1412
    %v1414 = vand.u32 %v1413, 4294901760
    %1415 = vmatpush.msra.mxu0 %v1414
    %v1416 = vand.u32 %v67, 4294901760
    %v1417 = vsub.f32 %v67, %v1416
    %v1418 = vand.u32 %v1417, 4294901760
    %1419 = vmatpush.msra.mxu0 %v1418
    %v1420 = vand.u32 %v65, 4294901760
    %v1421 = vsub.f32 %v65, %v1420
    %v1422 = vand.u32 %v1421, 4294901760
    %1423 = vmatpush.msra.mxu0 %v1422
    %v1424 = vand.u32 %v31, 4294901760
    %1425 = vmatmul.f32.gmra.mxu0 %v1424
    %v1426 = vpop.f32.mrf.mxu0
    %v1427 = vadd.f32 %v1358, %v1426
    %1428 = vdwg.mxu0
    %v1429 = vand.u32 %v95, 4294901760
    %1430 = vmatpush.msra.mxu0 %v1429
    %v1431 = vand.u32 %v93, 4294901760
    %1432 = vmatpush.msra.mxu0 %v1431
    %v1433 = vand.u32 %v91, 4294901760
    %1434 = vmatpush.msra.mxu0 %v1433
    %v1435 = vand.u32 %v89, 4294901760
    %1436 = vmatpush.msra.mxu0 %v1435
    %v1437 = vand.u32 %v87, 4294901760
    %1438 = vmatpush.msra.mxu0 %v1437
    %v1439 = vand.u32 %v85, 4294901760
    %1440 = vmatpush.msra.mxu0 %v1439
    %v1441 = vand.u32 %v83, 4294901760
    %1442 = vmatpush.msra.mxu0 %v1441
    %v1443 = vand.u32 %v81, 4294901760
    %1444 = vmatpush.msra.mxu0 %v1443
    %v1445 = vand.u32 %v79, 4294901760
    %1446 = vmatpush.msra.mxu0 %v1445
    %v1447 = vand.u32 %v77, 4294901760
    %1448 = vmatpush.msra.mxu0 %v1447
    %v1449 = vand.u32 %v75, 4294901760
    %1450 = vmatpush.msra.mxu0 %v1449
    %v1451 = vand.u32 %v73, 4294901760
    %1452 = vmatpush.msra.mxu0 %v1451
    %v1453 = vand.u32 %v71, 4294901760
    %1454 = vmatpush.msra.mxu0 %v1453
    %v1455 = vand.u32 %v69, 4294901760
    %1456 = vmatpush.msra.mxu0 %v1455
    %v1457 = vand.u32 %v67, 4294901760
    %1458 = vmatpush.msra.mxu0 %v1457
    %v1459 = vand.u32 %v65, 4294901760
    %1460 = vmatpush.msra.mxu0 %v1459
    %v1461 = vand.u32 %v31, 4294901760
    %1462 = vmatmul.f32.gmra.mxu0 %v1461
    %v1463 = vpop.f32.mrf.mxu0
    %v1464 = vadd.f32 %v1427, %v1463
    %1465 = vdwg.mxu0
    %1466 = vst [vmem:[%s3] sm:$0xff] %v782
    %1467 = vst [vmem:[%s3 + $0x8] sm:$0xff] %v1464
    // Predicated region
    $region18: #{_forward_fused.1} parent=1 // pred_check
      _
    $region19: #{_forward_fused.1} parent=1 // pred_check_branch
      %1469 = sbr.rel (0) target = $region21
    $region20: #{_forward_fused.1} parent=1 // pred_region
      _
    $region21: #{_forward_fused.1} parent=1 // pred_fallthru
      _
    // Predicated region
    $region22: #{_forward_fused.1} parent=1 // pred_check
      _
    $region23: #{_forward_fused.1} parent=1 // pred_check_branch
      %1471 = sbr.rel (0) target = $region25
    $region24: #{_forward_fused.1} parent=1 // pred_region
      _
    $region25: #{_forward_fused.1} parent=1 // pred_fallthru
      _
    %1472 = vsyncpa [#allocation3], 1

</llo_original>
